<compile_context>
chip_gen: v7x
topology: tpu7x:2x2x1
jax: 0.10.0
libtpu: 0.0.40
codegen_flags: <defaults>
</compile_context>

<pallas_src>
import functools

import jax
import jax.numpy as jnp
from jax.experimental import pallas as pl
from jax.experimental.pallas import tpu as pltpu


# ----------------------------- in-kernel helpers -----------------------------

def _layer_norm(x, gamma, beta, eps):
    mu = jnp.mean(x, axis=-1, keepdims=True)
    var = jnp.mean(jnp.square(x - mu), axis=-1, keepdims=True)
    return (x - mu) * jax.lax.rsqrt(var + eps) * gamma + beta


def _gelu_pytorch_tanh(x):
    # "gelu_pytorch_tanh" (SigLIP2's hidden_act): tanh approximation of GELU.
    c = 0.7978845608028654  # sqrt(2/pi)
    return 0.5 * x * (1.0 + jnp.tanh(c * (x + 0.044715 * x * x * x)))


# --------------------------------- kernel ------------------------------------

def encoder_kernel(
    mask_ref, x_ref,
    ln1g_ref, ln1b_ref,
    wqkv_ref, bqkv_ref, wo_ref, bo_ref,
    ln2g_ref, ln2b_ref,
    w1_ref, b1_ref, w2_ref, b2_ref,
    o_ref,
    ctx_ref,
    *, num_heads, head_dim, eps, batch_tile, seq_len):
    layer = pl.program_id(1)
    Bt, S = batch_tile, seq_len
    D = num_heads * head_dim

    # Layer 0: pull the input hidden state into the resident output block.
    @pl.when(layer == 0)
    def _():
        o_ref[...] = x_ref[...]

    x = o_ref[...].reshape(Bt * S, D)      # (Bt*S, D) f32, resident across layers
    key_mask = mask_ref[...]               # (Bt, 1, S) additive key mask

    # ------------------------- self-attention block --------------------------
    h = _layer_norm(x, ln1g_ref[0], ln1b_ref[0], eps)
    qkv = jnp.dot(h.astype(jnp.bfloat16), wqkv_ref[0],
                  preferred_element_type=jnp.float32) + bqkv_ref[0]     # (Bt*S, 3D)
    q3 = qkv[:, :D].reshape(Bt, S, D).astype(jnp.bfloat16)              # scale folded
    k3 = qkv[:, D:2 * D].reshape(Bt, S, D).astype(jnp.bfloat16)
    v3 = qkv[:, 2 * D:].reshape(Bt, S, D).astype(jnp.bfloat16)

    # TODO(synk): at very large head counts a lax.fori_loop over heads would
    # further bound liveness, but it needs dynamic lane-offset slices/stores
    # (risky Mosaic lowering path); heads stay a static unroll here and each
    # head's context is written straight to the VMEM slab so nothing is
    # carried in SSA form across iterations.
    for hh in range(num_heads):
        lo = hh * head_dim
        qh = q3[:, :, lo:lo + head_dim]                                 # (Bt, S, hd)
        kh = k3[:, :, lo:lo + head_dim]
        vh = v3[:, :, lo:lo + head_dim]
        s = jnp.einsum("bqd,bkd->bqk", qh, kh,
                       preferred_element_type=jnp.float32)              # (Bt, S, S)
        s = s + key_mask
        s = s - jnp.max(s, axis=-1, keepdims=True)
        e = jnp.exp(s)
        p = e * pl.reciprocal(jnp.sum(e, axis=-1, keepdims=True), approx=True)
        ctx = jnp.einsum("bqk,bkd->bqd", p.astype(jnp.bfloat16), vh,
                         preferred_element_type=jnp.float32)            # (Bt, S, hd)
        ctx_ref[:, :, lo:lo + head_dim] = ctx.astype(jnp.bfloat16)

    # Single full-K out-projection over the assembled (Bt*S, D) context slab.
    attn = jnp.dot(ctx_ref[...].reshape(Bt * S, D), wo_ref[0],
                   preferred_element_type=jnp.float32) + bo_ref[0]      # (Bt*S, D)
    x = x + attn                            # residual 1

    # -------------------------------- MLP ------------------------------------
    h2 = _layer_norm(x, ln2g_ref[0], ln2b_ref[0], eps)
    m = jnp.dot(h2.astype(jnp.bfloat16), w1_ref[0],
                preferred_element_type=jnp.float32) + b1_ref[0]
    m = _gelu_pytorch_tanh(m)
    m = jnp.dot(m.astype(jnp.bfloat16), w2_ref[0],
                preferred_element_type=jnp.float32) + b2_ref[0]
    o_ref[...] = (x + m).reshape(Bt, S, D)  # residual 2


# -------------------------------- wrapper -------------------------------------

def siglip2_encoder(inputs_embeds, attention_mask, params, *, num_heads,
                    eps=1e-6, batch_tile=None,
                    vmem_limit_bytes=100 * 1024 * 1024):
    """attention_mask: (B, S) binary mask (1 = keep, 0 = padded), or None."""
    B, S, D = inputs_embeds.shape
    L = len(params)
    assert D % num_heads == 0
    head_dim = D // num_heads
    scale = head_dim ** -0.5
    I = params[0]["w1"].shape[-1]

    # Batch blocking: amortize per-layer weight DMA over Bt batch rows.
    if batch_tile is None:
        batch_tile = next(bt for bt in (8, 4, 2, 1) if B % bt == 0)
    assert B % batch_tile == 0
    Bt = batch_tile

    # ---- host-side prep: fuse QKV, fold scale, stack layers, cast matmul
    #      weights to bf16 (halves weight VMEM/HBM traffic) ----
    wqkv = jnp.stack([jnp.concatenate([p["wq"] * scale, p["wk"], p["wv"]], axis=1)
                      for p in params]).astype(jnp.bfloat16)            # (L, D, 3D)
    bqkv = jnp.stack([jnp.concatenate([p["bq"] * scale, p["bk"], p["bv"]], axis=1)
                      for p in params])                                  # (L, 1, 3D)
    wo = jnp.stack([p["wo"] for p in params]).astype(jnp.bfloat16)       # (L, D, D)
    bo = jnp.stack([p["bo"] for p in params])                            # (L, 1, D)
    ln1g = jnp.stack([p["ln1_g"] for p in params])
    ln1b = jnp.stack([p["ln1_b"] for p in params])
    ln2g = jnp.stack([p["ln2_g"] for p in params])
    ln2b = jnp.stack([p["ln2_b"] for p in params])
    w1 = jnp.stack([p["w1"] for p in params]).astype(jnp.bfloat16)       # (L, D, I)
    b1 = jnp.stack([p["b1"] for p in params])                            # (L, 1, I)
    w2 = jnp.stack([p["w2"] for p in params]).astype(jnp.bfloat16)       # (L, I, D)
    b2 = jnp.stack([p["b2"] for p in params])                            # (L, 1, D)

    # Rank-1 additive key mask (padding masks only depend on the key position).
    if attention_mask is None:
        key_mask = jnp.zeros((B, 1, S), jnp.float32)
    else:
        key_mask = jnp.where(attention_mask[:, None, :] > 0, 0.0, -1e9
                             ).astype(jnp.float32)                       # (B, 1, S)

    kernel = functools.partial(encoder_kernel, num_heads=num_heads,
                               head_dim=head_dim, eps=eps,
                               batch_tile=Bt, seq_len=S)

    def lspec(shape):   # per-layer stacked parameter, indexed by the layer axis
        nz = len(shape)
        return pl.BlockSpec((1,) + shape, lambda b, l, _n=nz: (l,) + (0,) * _n)

    in_specs = [
        pl.BlockSpec((Bt, 1, S), lambda b, l: (b, 0, 0)),   # key mask
        pl.BlockSpec((Bt, S, D), lambda b, l: (b, 0, 0)),   # input hidden states
        lspec((1, D)), lspec((1, D)),                       # ln1 gamma/beta
        lspec((D, 3 * D)), lspec((1, 3 * D)),               # fused q|k|v
        lspec((D, D)), lspec((1, D)),                       # out proj / bias
        lspec((1, D)), lspec((1, D)),                       # ln2 gamma/beta
        lspec((D, I)), lspec((1, I)),                       # fc1
        lspec((I, D)), lspec((1, D)),                       # fc2
    ]
    out_spec = pl.BlockSpec((Bt, S, D), lambda b, l: (b, 0, 0))

    # Advisory cost estimate so XLA schedules surrounding ops sensibly.
    flops = 2 * B * L * S * (4 * D * D + 2 * S * D + 2 * D * I)
    transcendentals = B * L * (num_heads * S * S + S * I + 2 * S)
    n_bblocks = B // Bt
    weight_bytes = 2 * (wqkv.size + wo.size + w1.size + w2.size)
    small_bytes = 4 * (bqkv.size + bo.size + b1.size + b2.size
                       + ln1g.size + ln1b.size + ln2g.size + ln2b.size)
    bytes_accessed = (n_bblocks * (weight_bytes + small_bytes)
                      + 4 * 2 * B * S * D + 4 * key_mask.size)

    return pl.pallas_call(
        kernel,
        out_shape=jax.ShapeDtypeStruct((B, S, D), jnp.float32),
        grid_spec=pltpu.PrefetchScalarGridSpec(
            num_scalar_prefetch=0,
            grid=(B // Bt, L),
            in_specs=in_specs,
            out_specs=out_spec,
            scratch_shapes=[pltpu.VMEM((Bt, S, D), jnp.bfloat16)],   # context slab
        ),
        compiler_params=pltpu.CompilerParams(
            dimension_semantics=("parallel", "arbitrary"),
            vmem_limit_bytes=vmem_limit_bytes),
        cost_estimate=pl.CostEstimate(flops=int(flops),
                                      transcendentals=int(transcendentals),
                                      bytes_accessed=int(bytes_accessed)),
    )(key_mask, inputs_embeds,
      ln1g, ln1b, wqkv, bqkv, wo, bo, ln2g, ln2b, w1, b1, w2, b2)


# ------------------------- pure-JAX f32 reference (check) ---------------------

def _ref_encoder(x, binary_mask, params, *, num_heads, eps=1e-6):
    B, S, D = x.shape
    hd = D // num_heads
    scale = hd ** -0.5
    mask4d = jnp.where(binary_mask[:, None, None, :] > 0, 0.0, -1e9).astype(jnp.float32)
    mask4d = jnp.broadcast_to(mask4d, (B, 1, S, S))
    for p in params:
        h = _layer_norm(x, p["ln1_g"], p["ln1_b"], eps)
        q = h @ p["wq"] + p["bq"]
        k = h @ p["wk"] + p["bk"]
        v = h @ p["wv"] + p["bv"]
        q = q.reshape(B, S, num_heads, hd).transpose(0, 2, 1, 3) * scale
        k = k.reshape(B, S, num_heads, hd).transpose(0, 2, 1, 3)
        v = v.reshape(B, S, num_heads, hd).transpose(0, 2, 1, 3)
        s = jnp.einsum("bhqd,bhkd->bhqk", q, k) + mask4d
        a = jax.nn.softmax(s, axis=-1)
        o = jnp.einsum("bhqk,bhkd->bhqd", a, v).transpose(0, 2, 1, 3).reshape(B, S, D)
        o = o @ p["wo"] + p["bo"]
        x = x + o
        h2 = _layer_norm(x, p["ln2_g"], p["ln2_b"], eps)
        m = _gelu_pytorch_tanh(h2 @ p["w1"] + p["b1"]) @ p["w2"] + p["b2"]
        x = x + m
    return x


# ------------------------------ param init ------------------------------------

def init_params(key, num_layers, D, I):
    params = []
    for _ in range(num_layers):
        keys = jax.random.split(key, 7)
        key = keys[0]
        p = {
            "ln1_g": jnp.ones((1, D), jnp.float32),
            "ln1_b": jnp.zeros((1, D), jnp.float32),
            "wq": 0.02 * jax.random.normal(keys[1], (D, D), jnp.float32),
            "bq": jnp.zeros((1, D), jnp.float32),
            "wk": 0.02 * jax.random.normal(keys[2], (D, D), jnp.float32),
            "bk": jnp.zeros((1, D), jnp.float32),
            "wv": 0.02 * jax.random.normal(keys[3], (D, D), jnp.float32),
            "bv": jnp.zeros((1, D), jnp.float32),
            "wo": 0.02 * jax.random.normal(keys[4], (D, D), jnp.float32),
            "bo": jnp.zeros((1, D), jnp.float32),
            "ln2_g": jnp.ones((1, D), jnp.float32),
            "ln2_b": jnp.zeros((1, D), jnp.float32),
            "w1": 0.02 * jax.random.normal(keys[5], (D, I), jnp.float32),
            "b1": jnp.zeros((1, I), jnp.float32),
            "w2": 0.02 * jax.random.normal(keys[6], (I, D), jnp.float32),
            "b2": jnp.zeros((1, D), jnp.float32),
        }
        params.append(p)
    return params


# ---------------------------------- main --------------------------------------

if __name__ == "__main__":
    B, S, D = 2, 8, 32
    num_heads = 2
    intermediate = 64
    num_layers = 2

    key = jax.random.PRNGKey(0)
    k_x, k_p = jax.random.split(key)
    inputs_embeds = jax.random.normal(k_x, (B, S, D), jnp.float32)

    # Binary (B, S) padding mask: 1 = attend, 0 = masked (last two keys of batch 1).
    binary_mask = jnp.ones((B, S), jnp.float32).at[1, -2:].set(0.0)

    params = init_params(k_p, num_layers, D, intermediate)

    out = siglip2_encoder(inputs_embeds, binary_mask, params, num_heads=num_heads)
    out = jax.block_until_ready(out)

    ref = _ref_encoder(inputs_embeds, binary_mask, params, num_heads=num_heads)
    assert out.shape == (B, S, D)
    max_err = float(jnp.max(jnp.abs(out - ref)))
    # bf16 MXU inputs + approx reciprocal => looser tolerance than pure f32.
    assert jnp.allclose(out, ref, rtol=2e-2, atol=2e-2), f"max abs err {max_err}"

    print("KERNEL_OK")
</pallas_src>

<mosaic_0001>
module attributes {stable_mosaic.version = 11 : i64} {
  func.func @encoder_kernel(%arg0: i32, %arg1: i32, %arg2: memref<2x1x8xf32, #tpu.memory_space<vmem>>, %arg3: memref<2x8x32xf32, #tpu.memory_space<vmem>>, %arg4: memref<1x1x32xf32, #tpu.memory_space<vmem>>, %arg5: memref<1x1x32xf32, #tpu.memory_space<vmem>>, %arg6: memref<1x32x96xbf16, #tpu.memory_space<vmem>>, %arg7: memref<1x1x96xf32, #tpu.memory_space<vmem>>, %arg8: memref<1x32x32xbf16, #tpu.memory_space<vmem>>, %arg9: memref<1x1x32xf32, #tpu.memory_space<vmem>>, %arg10: memref<1x1x32xf32, #tpu.memory_space<vmem>>, %arg11: memref<1x1x32xf32, #tpu.memory_space<vmem>>, %arg12: memref<1x32x64xbf16, #tpu.memory_space<vmem>>, %arg13: memref<1x1x64xf32, #tpu.memory_space<vmem>>, %arg14: memref<1x64x32xbf16, #tpu.memory_space<vmem>>, %arg15: memref<1x1x32xf32, #tpu.memory_space<vmem>>, %arg16: memref<2x8x32xf32, #tpu.memory_space<vmem>>, %arg17: memref<2x8x32xbf16, #tpu.memory_space<vmem>>) attributes {dimension_semantics = [#tpu.dimension_semantics<parallel>, #tpu.dimension_semantics<arbitrary>], iteration_bounds = array<i64: 1, 2>, scalar_prefetch = 0 : i64, scratch_operands = 1 : i64, tpu.core_type = #tpu.core_type<tc>, window_params = [{transform_indices = @transform_0, window_bounds = array<i64: 2, 1, 8>}, {transform_indices = @transform_1, window_bounds = array<i64: 2, 8, 32>}, {transform_indices = @transform_2, window_bounds = array<i64: 1, 1, 32>}, {transform_indices = @transform_3, window_bounds = array<i64: 1, 1, 32>}, {transform_indices = @transform_4, window_bounds = array<i64: 1, 32, 96>}, {transform_indices = @transform_5, window_bounds = array<i64: 1, 1, 96>}, {transform_indices = @transform_6, window_bounds = array<i64: 1, 32, 32>}, {transform_indices = @transform_7, window_bounds = array<i64: 1, 1, 32>}, {transform_indices = @transform_8, window_bounds = array<i64: 1, 1, 32>}, {transform_indices = @transform_9, window_bounds = array<i64: 1, 1, 32>}, {transform_indices = @transform_10, window_bounds = array<i64: 1, 32, 64>}, {transform_indices = @transform_11, window_bounds = array<i64: 1, 1, 64>}, {transform_indices = @transform_12, window_bounds = array<i64: 1, 64, 32>}, {transform_indices = @transform_13, window_bounds = array<i64: 1, 1, 32>}, {transform_indices = @transform_14, window_bounds = array<i64: 2, 8, 32>}]} {
    %c0_i32 = arith.constant 0 : i32
    %0 = arith.cmpi eq, %arg1, %c0_i32 : i32
    %1 = arith.extui %0 : i1 to i32
    %c0_i32_0 = arith.constant 0 : i32
    %2 = arith.cmpi ne, %1, %c0_i32_0 : i32
    scf.if %2 {
      %c0_78 = arith.constant 0 : index
      %c0_79 = arith.constant 0 : index
      %c0_80 = arith.constant 0 : index
      %157 = vector.load %arg3[%c0_78, %c0_79, %c0_80] : memref<2x8x32xf32, #tpu.memory_space<vmem>>, vector<2x8x32xf32>
      %c0_81 = arith.constant 0 : index
      %c0_82 = arith.constant 0 : index
      %c0_83 = arith.constant 0 : index
      %158 = vector.load %arg16[%c0_81, %c0_82, %c0_83] : memref<2x8x32xf32, #tpu.memory_space<vmem>>, vector<2x8x32xf32>
      tpu.vector_store %arg16[%c0_81, %c0_82, %c0_83], %157 {strides = array<i32>} : memref<2x8x32xf32, #tpu.memory_space<vmem>>, vector<2x8x32xf32>,
    } else {
    }
    %c0 = arith.constant 0 : index
    %c0_1 = arith.constant 0 : index
    %c0_2 = arith.constant 0 : index
    %3 = vector.load %arg16[%c0, %c0_1, %c0_2] : memref<2x8x32xf32, #tpu.memory_space<vmem>>, vector<2x8x32xf32>
    %4 = vector.shape_cast %3 : vector<2x8x32xf32> to vector<16x32xf32>
    %c0_3 = arith.constant 0 : index
    %c0_4 = arith.constant 0 : index
    %c0_5 = arith.constant 0 : index
    %5 = vector.load %arg2[%c0_3, %c0_4, %c0_5] : memref<2x1x8xf32, #tpu.memory_space<vmem>>, vector<2x1x8xf32>
    %c0_6 = arith.constant 0 : index
    %c0_7 = arith.constant 0 : index
    %c0_8 = arith.constant 0 : index
    %6 = vector.load %arg4[%c0_6, %c0_7, %c0_8] : memref<1x1x32xf32, #tpu.memory_space<vmem>>, vector<1x1x32xf32>
    %7 = vector.shape_cast %6 : vector<1x1x32xf32> to vector<1x32xf32>
    %c0_9 = arith.constant 0 : index
    %c0_10 = arith.constant 0 : index
    %c0_11 = arith.constant 0 : index
    %8 = vector.load %arg5[%c0_9, %c0_10, %c0_11] : memref<1x1x32xf32, #tpu.memory_space<vmem>>, vector<1x1x32xf32>
    %9 = vector.shape_cast %8 : vector<1x1x32xf32> to vector<1x32xf32>
    %cst = arith.constant dense<0.000000e+00> : vector<16xf32>
    %10 = vector.multi_reduction <add>, %4, %cst [1] : vector<16x32xf32> to vector<16xf32>
    %11 = vector.shape_cast %10 : vector<16xf32> to vector<16x1xf32>
    %cst_12 = arith.constant 3.200000e+01 : f32
    %12 = vector.broadcast %cst_12 : f32 to vector<16x1xf32>
    %13 = arith.divf %11, %12 : vector<16x1xf32>
    %14 = vector.broadcast %13 : vector<16x1xf32> to vector<16x32xf32>
    %15 = arith.subf %4, %14 : vector<16x32xf32>
    %16 = arith.mulf %15, %15 : vector<16x32xf32>
    %cst_13 = arith.constant dense<0.000000e+00> : vector<16xf32>
    %17 = vector.multi_reduction <add>, %16, %cst_13 [1] : vector<16x32xf32> to vector<16xf32>
    %18 = vector.shape_cast %17 : vector<16xf32> to vector<16x1xf32>
    %cst_14 = arith.constant 3.200000e+01 : f32
    %19 = vector.broadcast %cst_14 : f32 to vector<16x1xf32>
    %20 = arith.divf %18, %19 : vector<16x1xf32>
    %21 = vector.broadcast %13 : vector<16x1xf32> to vector<16x32xf32>
    %22 = arith.subf %4, %21 : vector<16x32xf32>
    %cst_15 = arith.constant 9.99999997E-7 : f32
    %23 = vector.broadcast %cst_15 : f32 to vector<16x1xf32>
    %24 = arith.addf %20, %23 : vector<16x1xf32>
    %25 = math.rsqrt %24 : vector<16x1xf32>
    %26 = vector.broadcast %25 : vector<16x1xf32> to vector<16x32xf32>
    %27 = arith.mulf %22, %26 : vector<16x32xf32>
    %28 = vector.broadcast %7 : vector<1x32xf32> to vector<16x32xf32>
    %29 = arith.mulf %27, %28 : vector<16x32xf32>
    %30 = vector.broadcast %9 : vector<1x32xf32> to vector<16x32xf32>
    %31 = arith.addf %29, %30 : vector<16x32xf32>
    %32 = arith.truncf %31 : vector<16x32xf32> to vector<16x32xbf16>
    %c0_16 = arith.constant 0 : index
    %c0_17 = arith.constant 0 : index
    %c0_18 = arith.constant 0 : index
    %33 = vector.load %arg6[%c0_16, %c0_17, %c0_18] : memref<1x32x96xbf16, #tpu.memory_space<vmem>>, vector<1x32x96xbf16>
    %34 = vector.shape_cast %33 : vector<1x32x96xbf16> to vector<32x96xbf16>
    %cst_19 = arith.constant dense<0.000000e+00> : vector<16x96xf32>
    %35 = tpu.matmul %32, %34, %cst_19 {dimension_numbers = #tpu.dot_dimension_numbers<[1], [0], [0], [1], [0, 0, 1, 1], [], []>} : vector<16x32xbf16>, vector<32x96xbf16>, vector<16x96xf32> -> vector<16x96xf32>
    %c0_20 = arith.constant 0 : index
    %c0_21 = arith.constant 0 : index
    %c0_22 = arith.constant 0 : index
    %36 = vector.load %arg7[%c0_20, %c0_21, %c0_22] : memref<1x1x96xf32, #tpu.memory_space<vmem>>, vector<1x1x96xf32>
    %37 = vector.shape_cast %36 : vector<1x1x96xf32> to vector<1x96xf32>
    %38 = vector.broadcast %37 : vector<1x96xf32> to vector<16x96xf32>
    %39 = arith.addf %35, %38 : vector<16x96xf32>
    %40 = vector.extract_strided_slice %39 {offsets = [0, 0], sizes = [16, 32], strides = [1, 1]} : vector<16x96xf32> to vector<16x32xf32>
    %41 = vector.shape_cast %40 : vector<16x32xf32> to vector<2x8x32xf32>
    %42 = arith.truncf %41 : vector<2x8x32xf32> to vector<2x8x32xbf16>
    %43 = vector.extract_strided_slice %39 {offsets = [0, 32], sizes = [16, 32], strides = [1, 1]} : vector<16x96xf32> to vector<16x32xf32>
    %44 = vector.shape_cast %43 : vector<16x32xf32> to vector<2x8x32xf32>
    %45 = arith.truncf %44 : vector<2x8x32xf32> to vector<2x8x32xbf16>
    %46 = vector.extract_strided_slice %39 {offsets = [0, 64], sizes = [16, 32], strides = [1, 1]} : vector<16x96xf32> to vector<16x32xf32>
    %47 = vector.shape_cast %46 : vector<16x32xf32> to vector<2x8x32xf32>
    %48 = arith.truncf %47 : vector<2x8x32xf32> to vector<2x8x32xbf16>
    %49 = vector.extract_strided_slice %42 {offsets = [0, 0, 0], sizes = [2, 8, 16], strides = [1, 1, 1]} : vector<2x8x32xbf16> to vector<2x8x16xbf16>
    %50 = vector.extract_strided_slice %45 {offsets = [0, 0, 0], sizes = [2, 8, 16], strides = [1, 1, 1]} : vector<2x8x32xbf16> to vector<2x8x16xbf16>
    %51 = vector.extract_strided_slice %48 {offsets = [0, 0, 0], sizes = [2, 8, 16], strides = [1, 1, 1]} : vector<2x8x32xbf16> to vector<2x8x16xbf16>
    "tpu.trace_start"() <{level = 10 : i32, message = "bqd,bkd->bqk"}> : () -> ()
    %cst_23 = arith.constant dense<0.000000e+00> : vector<2x8x8xf32>
    %52 = tpu.matmul %49, %50, %cst_23 {dimension_numbers = #tpu.dot_dimension_numbers<[2], [2], [1], [1], [0, 0, 0, 1, 1, 1], [0], [0]>} : vector<2x8x16xbf16>, vector<2x8x16xbf16>, vector<2x8x8xf32> -> vector<2x8x8xf32>
    "tpu.trace_stop"() : () -> ()
    %53 = vector.broadcast %5 : vector<2x1x8xf32> to vector<2x8x8xf32>
    %54 = arith.addf %52, %53 : vector<2x8x8xf32>
    %cst_24 = arith.constant dense<0xFF800000> : vector<2x8xf32>
    %55 = vector.multi_reduction <maximumf>, %54, %cst_24 [2] : vector<2x8x8xf32> to vector<2x8xf32>
    %56 = vector.shape_cast %55 : vector<2x8xf32> to vector<2x8x1xf32>
    %57 = vector.broadcast %56 : vector<2x8x1xf32> to vector<2x8x8xf32>
    %58 = arith.subf %54, %57 : vector<2x8x8xf32>
    %59 = math.exp %58 : vector<2x8x8xf32>
    %cst_25 = arith.constant dense<0.000000e+00> : vector<2x8xf32>
    %60 = vector.multi_reduction <add>, %59, %cst_25 [2] : vector<2x8x8xf32> to vector<2x8xf32>
    %61 = vector.shape_cast %60 : vector<2x8xf32> to vector<2x8x1xf32>
    %62 = tpu.reciprocal %61 {approx = true} : vector<2x8x1xf32> -> vector<2x8x1xf32>
    %63 = vector.broadcast %62 : vector<2x8x1xf32> to vector<2x8x8xf32>
    %64 = arith.mulf %59, %63 : vector<2x8x8xf32>
    %65 = arith.truncf %64 : vector<2x8x8xf32> to vector<2x8x8xbf16>
    "tpu.trace_start"() <{level = 10 : i32, message = "bqk,bkd->bqd"}> : () -> ()
    %cst_26 = arith.constant dense<0.000000e+00> : vector<2x8x16xf32>
    %66 = tpu.matmul %65, %51, %cst_26 {dimension_numbers = #tpu.dot_dimension_numbers<[2], [1], [1], [2], [0, 0, 0, 1, 1, 2], [0], [0]>} : vector<2x8x8xbf16>, vector<2x8x16xbf16>, vector<2x8x16xf32> -> vector<2x8x16xf32>
    "tpu.trace_stop"() : () -> ()
    %67 = arith.truncf %66 : vector<2x8x16xf32> to vector<2x8x16xbf16>
    %c0_27 = arith.constant 0 : index
    %c0_28 = arith.constant 0 : index
    %c0_29 = arith.constant 0 : index
    %68 = vector.load %arg17[%c0_27, %c0_28, %c0_29] : memref<2x8x32xbf16, #tpu.memory_space<vmem>>, vector<2x8x16xbf16>
    tpu.vector_store %arg17[%c0_27, %c0_28, %c0_29], %67 {strides = array<i32>} : memref<2x8x32xbf16, #tpu.memory_space<vmem>>, vector<2x8x16xbf16>,
    %69 = vector.extract_strided_slice %42 {offsets = [0, 0, 16], sizes = [2, 8, 16], strides = [1, 1, 1]} : vector<2x8x32xbf16> to vector<2x8x16xbf16>
    %70 = vector.extract_strided_slice %45 {offsets = [0, 0, 16], sizes = [2, 8, 16], strides = [1, 1, 1]} : vector<2x8x32xbf16> to vector<2x8x16xbf16>
    %71 = vector.extract_strided_slice %48 {offsets = [0, 0, 16], sizes = [2, 8, 16], strides = [1, 1, 1]} : vector<2x8x32xbf16> to vector<2x8x16xbf16>
    "tpu.trace_start"() <{level = 10 : i32, message = "bqd,bkd->bqk"}> : () -> ()
    %cst_30 = arith.constant dense<0.000000e+00> : vector<2x8x8xf32>
    %72 = tpu.matmul %69, %70, %cst_30 {dimension_numbers = #tpu.dot_dimension_numbers<[2], [2], [1], [1], [0, 0, 0, 1, 1, 1], [0], [0]>} : vector<2x8x16xbf16>, vector<2x8x16xbf16>, vector<2x8x8xf32> -> vector<2x8x8xf32>
    "tpu.trace_stop"() : () -> ()
    %73 = vector.broadcast %5 : vector<2x1x8xf32> to vector<2x8x8xf32>
    %74 = arith.addf %72, %73 : vector<2x8x8xf32>
    %cst_31 = arith.constant dense<0xFF800000> : vector<2x8xf32>
    %75 = vector.multi_reduction <maximumf>, %74, %cst_31 [2] : vector<2x8x8xf32> to vector<2x8xf32>
    %76 = vector.shape_cast %75 : vector<2x8xf32> to vector<2x8x1xf32>
    %77 = vector.broadcast %76 : vector<2x8x1xf32> to vector<2x8x8xf32>
    %78 = arith.subf %74, %77 : vector<2x8x8xf32>
    %79 = math.exp %78 : vector<2x8x8xf32>
    %cst_32 = arith.constant dense<0.000000e+00> : vector<2x8xf32>
    %80 = vector.multi_reduction <add>, %79, %cst_32 [2] : vector<2x8x8xf32> to vector<2x8xf32>
    %81 = vector.shape_cast %80 : vector<2x8xf32> to vector<2x8x1xf32>
    %82 = tpu.reciprocal %81 {approx = true} : vector<2x8x1xf32> -> vector<2x8x1xf32>
    %83 = vector.broadcast %82 : vector<2x8x1xf32> to vector<2x8x8xf32>
    %84 = arith.mulf %79, %83 : vector<2x8x8xf32>
    %85 = arith.truncf %84 : vector<2x8x8xf32> to vector<2x8x8xbf16>
    "tpu.trace_start"() <{level = 10 : i32, message = "bqk,bkd->bqd"}> : () -> ()
    %cst_33 = arith.constant dense<0.000000e+00> : vector<2x8x16xf32>
    %86 = tpu.matmul %85, %71, %cst_33 {dimension_numbers = #tpu.dot_dimension_numbers<[2], [1], [1], [2], [0, 0, 0, 1, 1, 2], [0], [0]>} : vector<2x8x8xbf16>, vector<2x8x16xbf16>, vector<2x8x16xf32> -> vector<2x8x16xf32>
    "tpu.trace_stop"() : () -> ()
    %87 = arith.truncf %86 : vector<2x8x16xf32> to vector<2x8x16xbf16>
    %c0_34 = arith.constant 0 : index
    %c0_35 = arith.constant 0 : index
    %c16 = arith.constant 16 : index
    %88 = vector.load %arg17[%c0_34, %c0_35, %c16] : memref<2x8x32xbf16, #tpu.memory_space<vmem>>, vector<2x8x16xbf16>
    tpu.vector_store %arg17[%c0_34, %c0_35, %c16], %87 {strides = array<i32>} : memref<2x8x32xbf16, #tpu.memory_space<vmem>>, vector<2x8x16xbf16>,
    %c0_36 = arith.constant 0 : index
    %c0_37 = arith.constant 0 : index
    %c0_38 = arith.constant 0 : index
    %89 = vector.load %arg17[%c0_36, %c0_37, %c0_38] : memref<2x8x32xbf16, #tpu.memory_space<vmem>>, vector<2x8x32xbf16>
    %90 = vector.shape_cast %89 : vector<2x8x32xbf16> to vector<16x32xbf16>
    %c0_39 = arith.constant 0 : index
    %c0_40 = arith.constant 0 : index
    %c0_41 = arith.constant 0 : index
    %91 = vector.load %arg8[%c0_39, %c0_40, %c0_41] : memref<1x32x32xbf16, #tpu.memory_space<vmem>>, vector<1x32x32xbf16>
    %92 = vector.shape_cast %91 : vector<1x32x32xbf16> to vector<32x32xbf16>
    %cst_42 = arith.constant dense<0.000000e+00> : vector<16x32xf32>
    %93 = tpu.matmul %90, %92, %cst_42 {dimension_numbers = #tpu.dot_dimension_numbers<[1], [0], [0], [1], [0, 0, 1, 1], [], []>} : vector<16x32xbf16>, vector<32x32xbf16>, vector<16x32xf32> -> vector<16x32xf32>
    %c0_43 = arith.constant 0 : index
    %c0_44 = arith.constant 0 : index
    %c0_45 = arith.constant 0 : index
    %94 = vector.load %arg9[%c0_43, %c0_44, %c0_45] : memref<1x1x32xf32, #tpu.memory_space<vmem>>, vector<1x1x32xf32>
    %95 = vector.shape_cast %94 : vector<1x1x32xf32> to vector<1x32xf32>
    %96 = vector.broadcast %95 : vector<1x32xf32> to vector<16x32xf32>
    %97 = arith.addf %93, %96 : vector<16x32xf32>
    %98 = arith.addf %4, %97 : vector<16x32xf32>
    %c0_46 = arith.constant 0 : index
    %c0_47 = arith.constant 0 : index
    %c0_48 = arith.constant 0 : index
    %99 = vector.load %arg10[%c0_46, %c0_47, %c0_48] : memref<1x1x32xf32, #tpu.memory_space<vmem>>, vector<1x1x32xf32>
    %100 = vector.shape_cast %99 : vector<1x1x32xf32> to vector<1x32xf32>
    %c0_49 = arith.constant 0 : index
    %c0_50 = arith.constant 0 : index
    %c0_51 = arith.constant 0 : index
    %101 = vector.load %arg11[%c0_49, %c0_50, %c0_51] : memref<1x1x32xf32, #tpu.memory_space<vmem>>, vector<1x1x32xf32>
    %102 = vector.shape_cast %101 : vector<1x1x32xf32> to vector<1x32xf32>
    %cst_52 = arith.constant dense<0.000000e+00> : vector<16xf32>
    %103 = vector.multi_reduction <add>, %98, %cst_52 [1] : vector<16x32xf32> to vector<16xf32>
    %104 = vector.shape_cast %103 : vector<16xf32> to vector<16x1xf32>
    %cst_53 = arith.constant 3.200000e+01 : f32
    %105 = vector.broadcast %cst_53 : f32 to vector<16x1xf32>
    %106 = arith.divf %104, %105 : vector<16x1xf32>
    %107 = vector.broadcast %106 : vector<16x1xf32> to vector<16x32xf32>
    %108 = arith.subf %98, %107 : vector<16x32xf32>
    %109 = arith.mulf %108, %108 : vector<16x32xf32>
    %cst_54 = arith.constant dense<0.000000e+00> : vector<16xf32>
    %110 = vector.multi_reduction <add>, %109, %cst_54 [1] : vector<16x32xf32> to vector<16xf32>
    %111 = vector.shape_cast %110 : vector<16xf32> to vector<16x1xf32>
    %cst_55 = arith.constant 3.200000e+01 : f32
    %112 = vector.broadcast %cst_55 : f32 to vector<16x1xf32>
    %113 = arith.divf %111, %112 : vector<16x1xf32>
    %114 = vector.broadcast %106 : vector<16x1xf32> to vector<16x32xf32>
    %115 = arith.subf %98, %114 : vector<16x32xf32>
    %cst_56 = arith.constant 9.99999997E-7 : f32
    %116 = vector.broadcast %cst_56 : f32 to vector<16x1xf32>
    %117 = arith.addf %113, %116 : vector<16x1xf32>
    %118 = math.rsqrt %117 : vector<16x1xf32>
    %119 = vector.broadcast %118 : vector<16x1xf32> to vector<16x32xf32>
    %120 = arith.mulf %115, %119 : vector<16x32xf32>
    %121 = vector.broadcast %100 : vector<1x32xf32> to vector<16x32xf32>
    %122 = arith.mulf %120, %121 : vector<16x32xf32>
    %123 = vector.broadcast %102 : vector<1x32xf32> to vector<16x32xf32>
    %124 = arith.addf %122, %123 : vector<16x32xf32>
    %125 = arith.truncf %124 : vector<16x32xf32> to vector<16x32xbf16>
    %c0_57 = arith.constant 0 : index
    %c0_58 = arith.constant 0 : index
    %c0_59 = arith.constant 0 : index
    %126 = vector.load %arg12[%c0_57, %c0_58, %c0_59] : memref<1x32x64xbf16, #tpu.memory_space<vmem>>, vector<1x32x64xbf16>
    %127 = vector.shape_cast %126 : vector<1x32x64xbf16> to vector<32x64xbf16>
    %cst_60 = arith.constant dense<0.000000e+00> : vector<16x64xf32>
    %128 = tpu.matmul %125, %127, %cst_60 {dimension_numbers = #tpu.dot_dimension_numbers<[1], [0], [0], [1], [0, 0, 1, 1], [], []>} : vector<16x32xbf16>, vector<32x64xbf16>, vector<16x64xf32> -> vector<16x64xf32>
    %c0_61 = arith.constant 0 : index
    %c0_62 = arith.constant 0 : index
    %c0_63 = arith.constant 0 : index
    %129 = vector.load %arg13[%c0_61, %c0_62, %c0_63] : memref<1x1x64xf32, #tpu.memory_space<vmem>>, vector<1x1x64xf32>
    %130 = vector.shape_cast %129 : vector<1x1x64xf32> to vector<1x64xf32>
    %131 = vector.broadcast %130 : vector<1x64xf32> to vector<16x64xf32>
    %132 = arith.addf %128, %131 : vector<16x64xf32>
    %cst_64 = arith.constant 5.000000e-01 : f32
    %133 = vector.broadcast %cst_64 : f32 to vector<16x64xf32>
    %134 = arith.mulf %133, %132 : vector<16x64xf32>
    %cst_65 = arith.constant 4.471500e-02 : f32
    %135 = vector.broadcast %cst_65 : f32 to vector<16x64xf32>
    %136 = arith.mulf %135, %132 : vector<16x64xf32>
    %137 = arith.mulf %136, %132 : vector<16x64xf32>
    %138 = arith.mulf %137, %132 : vector<16x64xf32>
    %139 = arith.addf %132, %138 : vector<16x64xf32>
    %cst_66 = arith.constant 0.797884583 : f32
    %140 = vector.broadcast %cst_66 : f32 to vector<16x64xf32>
    %141 = arith.mulf %140, %139 : vector<16x64xf32>
    %142 = math.tanh %141 : vector<16x64xf32>
    %cst_67 = arith.constant 1.000000e+00 : f32
    %143 = vector.broadcast %cst_67 : f32 to vector<16x64xf32>
    %144 = arith.addf %143, %142 : vector<16x64xf32>
    %145 = arith.mulf %134, %144 : vector<16x64xf32>
    %146 = arith.truncf %145 : vector<16x64xf32> to vector<16x64xbf16>
    %c0_68 = arith.constant 0 : index
    %c0_69 = arith.constant 0 : index
    %c0_70 = arith.constant 0 : index
    %147 = vector.load %arg14[%c0_68, %c0_69, %c0_70] : memref<1x64x32xbf16, #tpu.memory_space<vmem>>, vector<1x64x32xbf16>
    %148 = vector.shape_cast %147 : vector<1x64x32xbf16> to vector<64x32xbf16>
    %cst_71 = arith.constant dense<0.000000e+00> : vector<16x32xf32>
    %149 = tpu.matmul %146, %148, %cst_71 {dimension_numbers = #tpu.dot_dimension_numbers<[1], [0], [0], [1], [0, 0, 1, 1], [], []>} : vector<16x64xbf16>, vector<64x32xbf16>, vector<16x32xf32> -> vector<16x32xf32>
    %c0_72 = arith.constant 0 : index
    %c0_73 = arith.constant 0 : index
    %c0_74 = arith.constant 0 : index
    %150 = vector.load %arg15[%c0_72, %c0_73, %c0_74] : memref<1x1x32xf32, #tpu.memory_space<vmem>>, vector<1x1x32xf32>
    %151 = vector.shape_cast %150 : vector<1x1x32xf32> to vector<1x32xf32>
    %152 = vector.broadcast %151 : vector<1x32xf32> to vector<16x32xf32>
    %153 = arith.addf %149, %152 : vector<16x32xf32>
    %154 = arith.addf %98, %153 : vector<16x32xf32>
    %155 = vector.shape_cast %154 : vector<16x32xf32> to vector<2x8x32xf32>
    %c0_75 = arith.constant 0 : index
    %c0_76 = arith.constant 0 : index
    %c0_77 = arith.constant 0 : index
    %156 = vector.load %arg16[%c0_75, %c0_76, %c0_77] : memref<2x8x32xf32, #tpu.memory_space<vmem>>, vector<2x8x32xf32>
    tpu.vector_store %arg16[%c0_75, %c0_76, %c0_77], %155 {strides = array<i32>} : memref<2x8x32xf32, #tpu.memory_space<vmem>>, vector<2x8x32xf32>,
    return
  }
  func.func @transform_0(%arg0: i32, %arg1: i32) -> (i32, i32, i32) {
    %c0_i32 = arith.constant 0 : i32
    %c0_i32_0 = arith.constant 0 : i32
    %c0_i32_1 = arith.constant 0 : i32
    return %arg0, %c0_i32, %c0_i32_0 : i32, i32, i32
  }
  func.func @transform_1(%arg0: i32, %arg1: i32) -> (i32, i32, i32) {
    %c0_i32 = arith.constant 0 : i32
    %c0_i32_0 = arith.constant 0 : i32
    %c0_i32_1 = arith.constant 0 : i32
    return %arg0, %c0_i32, %c0_i32_0 : i32, i32, i32
  }
  func.func @transform_2(%arg0: i32, %arg1: i32) -> (i32, i32, i32) {
    %c0_i32 = arith.constant 0 : i32
    %c0_i32_0 = arith.constant 0 : i32
    %c0_i32_1 = arith.constant 0 : i32
    return %arg1, %c0_i32, %c0_i32_0 : i32, i32, i32
  }
  func.func @transform_3(%arg0: i32, %arg1: i32) -> (i32, i32, i32) {
    %c0_i32 = arith.constant 0 : i32
    %c0_i32_0 = arith.constant 0 : i32
    %c0_i32_1 = arith.constant 0 : i32
    return %arg1, %c0_i32, %c0_i32_0 : i32, i32, i32
  }
  func.func @transform_4(%arg0: i32, %arg1: i32) -> (i32, i32, i32) {
    %c0_i32 = arith.constant 0 : i32
    %c0_i32_0 = arith.constant 0 : i32
    %c0_i32_1 = arith.constant 0 : i32
    return %arg1, %c0_i32, %c0_i32_0 : i32, i32, i32
  }
  func.func @transform_5(%arg0: i32, %arg1: i32) -> (i32, i32, i32) {
    %c0_i32 = arith.constant 0 : i32
    %c0_i32_0 = arith.constant 0 : i32
    %c0_i32_1 = arith.constant 0 : i32
    return %arg1, %c0_i32, %c0_i32_0 : i32, i32, i32
  }
  func.func @transform_6(%arg0: i32, %arg1: i32) -> (i32, i32, i32) {
    %c0_i32 = arith.constant 0 : i32
    %c0_i32_0 = arith.constant 0 : i32
    %c0_i32_1 = arith.constant 0 : i32
    return %arg1, %c0_i32, %c0_i32_0 : i32, i32, i32
  }
  func.func @transform_7(%arg0: i32, %arg1: i32) -> (i32, i32, i32) {
    %c0_i32 = arith.constant 0 : i32
    %c0_i32_0 = arith.constant 0 : i32
    %c0_i32_1 = arith.constant 0 : i32
    return %arg1, %c0_i32, %c0_i32_0 : i32, i32, i32
  }
  func.func @transform_8(%arg0: i32, %arg1: i32) -> (i32, i32, i32) {
    %c0_i32 = arith.constant 0 : i32
    %c0_i32_0 = arith.constant 0 : i32
    %c0_i32_1 = arith.constant 0 : i32
    return %arg1, %c0_i32, %c0_i32_0 : i32, i32, i32
  }
  func.func @transform_9(%arg0: i32, %arg1: i32) -> (i32, i32, i32) {
    %c0_i32 = arith.constant 0 : i32
    %c0_i32_0 = arith.constant 0 : i32
    %c0_i32_1 = arith.constant 0 : i32
    return %arg1, %c0_i32, %c0_i32_0 : i32, i32, i32
  }
  func.func @transform_10(%arg0: i32, %arg1: i32) -> (i32, i32, i32) {
    %c0_i32 = arith.constant 0 : i32
    %c0_i32_0 = arith.constant 0 : i32
    %c0_i32_1 = arith.constant 0 : i32
    return %arg1, %c0_i32, %c0_i32_0 : i32, i32, i32
  }
  func.func @transform_11(%arg0: i32, %arg1: i32) -> (i32, i32, i32) {
    %c0_i32 = arith.constant 0 : i32
    %c0_i32_0 = arith.constant 0 : i32
    %c0_i32_1 = arith.constant 0 : i32
    return %arg1, %c0_i32, %c0_i32_0 : i32, i32, i32
  }
  func.func @transform_12(%arg0: i32, %arg1: i32) -> (i32, i32, i32) {
    %c0_i32 = arith.constant 0 : i32
    %c0_i32_0 = arith.constant 0 : i32
    %c0_i32_1 = arith.constant 0 : i32
    return %arg1, %c0_i32, %c0_i32_0 : i32, i32, i32
  }
  func.func @transform_13(%arg0: i32, %arg1: i32) -> (i32, i32, i32) {
    %c0_i32 = arith.constant 0 : i32
    %c0_i32_0 = arith.constant 0 : i32
    %c0_i32_1 = arith.constant 0 : i32
    return %arg1, %c0_i32, %c0_i32_0 : i32, i32, i32
  }
  func.func @transform_14(%arg0: i32, %arg1: i32) -> (i32, i32, i32) {
    %c0_i32 = arith.constant 0 : i32
    %c0_i32_0 = arith.constant 0 : i32
    %c0_i32_1 = arith.constant 0 : i32
    return %arg0, %c0_i32, %c0_i32_0 : i32, i32, i32
  }
}

</mosaic_0001>

<llo_original>
// kernel: tpu_custom_call.1
$region0: #{tpu_custom_call.1}
  #allocation0 [shape = 'u32[]', space=smem, size = 0x4, offset = 0x4, fixed_abs, tag = 'smem constant byte address 0x4 - core index']
  #allocation1 [shape = 'u32[144,128]{1,0:T(1,128)}', space=vmem, size = 0x12000, scoped, tag = 'internal scratch']
  #allocation2 [shape = 'bf16[2,8,32]{2,1,0:T(8,128)(2,1)}', space=vmem, size = 0x1000, scoped, tag = 'scratch operand']
  %s0 = inlined_call_operand.hbm [shape: f32[2,1,8], index: 0, kind: input, shape index: {}]
  %s1 = inlined_call_operand.hbm [shape: f32[2,8,32], index: 1, kind: input, shape index: {}]
  %s2 = inlined_call_operand.hbm [shape: f32[2,1,32], index: 2, kind: input, shape index: {}]
  %s3 = inlined_call_operand.hbm [shape: f32[2,1,32], index: 3, kind: input, shape index: {}]
  %s4 = inlined_call_operand.hbm [shape: bf16[2,32,96], index: 4, kind: input, shape index: {}]
  %s5 = inlined_call_operand.hbm [shape: f32[2,1,96], index: 5, kind: input, shape index: {}]
  %s6 = inlined_call_operand.hbm [shape: bf16[2,32,32], index: 6, kind: input, shape index: {}]
  %s7 = inlined_call_operand.hbm [shape: f32[2,1,32], index: 7, kind: input, shape index: {}]
  %s8 = inlined_call_operand.hbm [shape: f32[2,1,32], index: 8, kind: input, shape index: {}]
  %s9 = inlined_call_operand.hbm [shape: f32[2,1,32], index: 9, kind: input, shape index: {}]
  %s10 = inlined_call_operand.hbm [shape: bf16[2,32,64], index: 10, kind: input, shape index: {}]
  %s11 = inlined_call_operand.hbm [shape: f32[2,1,64], index: 11, kind: input, shape index: {}]
  %s12 = inlined_call_operand.hbm [shape: bf16[2,64,32], index: 12, kind: input, shape index: {}]
  %s13 = inlined_call_operand.hbm [shape: f32[2,1,32], index: 13, kind: input, shape index: {}]
  %s14 = inlined_call_operand.hbm [shape: f32[2,8,32], index: 14, kind: output, shape index: {}]
  %s15 = sld [smem:[#allocation0]]
  $region149: #{tpu_custom_call.1} parent=0
    _
  %s17 = ssub.s32 1, %s15
  %s18 = scalar_select 0, %s17, %s15
  $region1: #{tpu_custom_call.1} parent=0
    #allocation3 [shape = 'u8[1024]{0}', space=vmem, size = 0x400, scoped, tag = 'input window, operand 0, single buffered']
    #allocation4 [shape = 's32[2]{0}', space=sflag, size = 0x8, scoped, tag = 'scoped memory for tpu_custom_call.1']
    #allocation5 [shape = 's32[2]{0}', space=sflag, size = 0x8, scoped, tag = 'scoped memory for tpu_custom_call.1']
    #allocation6 [shape = 'u8[8192]{0}', space=vmem, size = 0x2000, scoped, tag = 'input window, operand 1, single buffered']
    #allocation7 [shape = 's32[1]{0}', space=sflag, size = 0x4, scoped, tag = 'scoped memory for tpu_custom_call.1']
    #allocation8 [shape = 'u8[1024]{0}', space=vmem, size = 0x400, scoped, tag = 'input window, operand 2']
    #allocation9 [shape = 'u8[1024]{0}', space=vmem, size = 0x400, scoped, tag = 'input window, operand 3']
    #allocation10 [shape = 'u8[16384]{0}', space=vmem, size = 0x4000, scoped, tag = 'input window, operand 4']
    #allocation11 [shape = 'u8[1024]{0}', space=vmem, size = 0x400, scoped, tag = 'input window, operand 5']
    #allocation12 [shape = 'u8[16384]{0}', space=vmem, size = 0x4000, scoped, tag = 'input window, operand 6']
    #allocation13 [shape = 'u8[1024]{0}', space=vmem, size = 0x400, scoped, tag = 'input window, operand 7']
    #allocation14 [shape = 'u8[1024]{0}', space=vmem, size = 0x400, scoped, tag = 'input window, operand 8']
    #allocation15 [shape = 'u8[1024]{0}', space=vmem, size = 0x400, scoped, tag = 'input window, operand 9']
    #allocation16 [shape = 'u8[16384]{0}', space=vmem, size = 0x4000, scoped, tag = 'input window, operand 10']
    #allocation17 [shape = 'u8[1024]{0}', space=vmem, size = 0x400, scoped, tag = 'input window, operand 11']
    #allocation18 [shape = 'u8[32768]{0}', space=vmem, size = 0x8000, scoped, tag = 'input window, operand 12']
    #allocation19 [shape = 'u8[1024]{0}', space=vmem, size = 0x400, scoped, tag = 'input window, operand 13']
    #allocation20 [shape = 'u8[8192]{0}', space=vmem, size = 0x2000, scoped, tag = 'output window, operand 0, single buffered']
    %19 = vsyncpa [#allocation4], 0
    %20 = vsyncpa [#allocation7], 0
    %21 = vsyncpa [#allocation5], 0
    loop: start=0, step=1, limit=4
    $region2: #{tpu_custom_call.1} parent=1 // loop_pre_header
      _
    $region3: #{tpu_custom_call.1} parent=1 // loop_header
      %s23 = sphi 0, %s27
      %p24 = scmp.ge.s32.totalorder %s23, 4
      %s30 = sphi 0, %s42
      %s31 = sphi 0, %s38
      %s32 = sphi 0, %s30
      %s33 = sphi 0, %s31
      %s34 = sphi 0, %s32
      %s35 = sphi 0, %s33
      %s45 = sphi 0, %s47
      %s48 = sphi 0, %s45
      %s49 = sphi 0, %s48
      %s65 = sphi 0, %s49
      %s71 = sphi 0, %s73
      %s74 = sphi 0, %s71
      %s75 = sphi 0, %s74
      %s91 = sphi 0, %s75
      %s97 = sphi 0, %s99
      %s100 = sphi 0, %s97
      %s101 = sphi 0, %s100
      %s117 = sphi 0, %s101
      %s123 = sphi 0, %s125
      %s126 = sphi 0, %s123
      %s127 = sphi 0, %s126
      %s143 = sphi 0, %s127
      %s149 = sphi 0, %s151
      %s152 = sphi 0, %s149
      %s153 = sphi 0, %s152
      %s169 = sphi 0, %s153
      %s175 = sphi 0, %s177
      %s178 = sphi 0, %s175
      %s179 = sphi 0, %s178
      %s195 = sphi 0, %s179
      %s201 = sphi 0, %s203
      %s204 = sphi 0, %s201
      %s205 = sphi 0, %s204
      %s221 = sphi 0, %s205
      %s227 = sphi 0, %s229
      %s230 = sphi 0, %s227
      %s231 = sphi 0, %s230
      %s247 = sphi 0, %s231
      %s253 = sphi 0, %s255
      %s256 = sphi 0, %s253
      %s257 = sphi 0, %s256
      %s273 = sphi 0, %s257
      %s279 = sphi 0, %s281
      %s282 = sphi 0, %s279
      %s283 = sphi 0, %s282
      %s299 = sphi 0, %s283
      %s305 = sphi 0, %s307
      %s308 = sphi 0, %s305
      %s309 = sphi 0, %s308
      %s325 = sphi 0, %s309
      %s331 = sphi 0, %s333
      %s334 = sphi 0, %s331
      %s335 = sphi 0, %s334
      %s351 = sphi 0, %s335
      %s357 = sphi 0, %s359
      %s360 = sphi 0, %s357
      %s361 = sphi 0, %s360
      %s377 = sphi 0, %s361
      %s383 = sphi 0, %s385
      %s386 = sphi 0, %s383
      %s387 = sphi 0, %s386
      %s403 = sphi 0, %s387
      %s409 = sphi 0, %s411
      %s412 = sphi 0, %s409
      %s413 = sphi 0, %s412
      %s429 = sphi 0, %s413
    $region4: #{tpu_custom_call.1} parent=1 // loop_header_branch
      %26 = sbr.rel (%p24) target = $region8
    $region5: #{tpu_custom_call.1} parent=1 // loop_body
      %s28 = ssub.s32 %s23, 1
      %s29 = ssub.s32 %s23, 2
      %s36 = sadd.s32 1, %s31
      %p37 = scmp.ge.s32.totalorder %s36, 2
      %s38 = scalar_select %p37, 0, %s36
      %s39 = sadd.s32 1, %s30
      %s40 = scalar_select %p37, %s39, %s30
      %p41 = scmp.ge.s32.totalorder %s40, 1
      %s42 = scalar_select %p41, 0, %s40
      %s43 = ssub.s32 %s30, %s42
      %p44 = scmp.eq.s32.totalorder %s43, 0
      %s46 = sadd.s32 %s45, 1
      %s47 = scalar_select %p44, %s45, %s46
      %p50 = pneg %p44
      %p51 = scmp.eq.s32.totalorder %s23, 1
      %p52 = por %p50, %p51
      %p53 = scmp.ne.s32.totalorder %s45, %s48
      %p54 = scmp.eq.s32.totalorder %s23, 0
      %p55 = por %p53, %p54
      %p56 = scmp.ne.s32.totalorder %s45, %s48
      %p57 = scmp.eq.s32.totalorder %s28, 1
      %p58 = por %p56, %p57
      %p59 = scmp.ne.s32.totalorder %s48, %s49
      %p60 = scmp.eq.s32.totalorder %s28, 0
      %p61 = por %p59, %p60
      %p62 = scmp.ne.s32.totalorder %s48, %s49
      %p63 = scmp.eq.s32.totalorder %s29, 1
      %p64 = por %p62, %p63
      %p66 = scmp.ne.s32.totalorder %s49, %s65
      %p67 = scmp.eq.s32.totalorder %s29, 0
      %p68 = por %p66, %p67
      %s69 = ssub.s32 %s30, %s42
      %p70 = scmp.eq.s32.totalorder %s69, 0
      %s72 = sadd.s32 %s71, 1
      %s73 = scalar_select %p70, %s71, %s72
      %p76 = pneg %p70
      %p77 = scmp.eq.s32.totalorder %s23, 1
      %p78 = por %p76, %p77
      %p79 = scmp.ne.s32.totalorder %s71, %s74
      %p80 = scmp.eq.s32.totalorder %s23, 0
      %p81 = por %p79, %p80
      %p82 = scmp.ne.s32.totalorder %s71, %s74
      %p83 = scmp.eq.s32.totalorder %s28, 1
      %p84 = por %p82, %p83
      %p85 = scmp.ne.s32.totalorder %s74, %s75
      %p86 = scmp.eq.s32.totalorder %s28, 0
      %p87 = por %p85, %p86
      %p88 = scmp.ne.s32.totalorder %s74, %s75
      %p89 = scmp.eq.s32.totalorder %s29, 1
      %p90 = por %p88, %p89
      %p92 = scmp.ne.s32.totalorder %s75, %s91
      %p93 = scmp.eq.s32.totalorder %s29, 0
      %p94 = por %p92, %p93
      %s95 = ssub.s32 %s31, %s38
      %p96 = scmp.eq.s32.totalorder %s95, 0
      %s98 = sadd.s32 %s97, 1
      %s99 = scalar_select %p96, %s97, %s98
      %p102 = pneg %p96
      %p103 = scmp.eq.s32.totalorder %s23, 1
      %p104 = por %p102, %p103
      %p105 = scmp.ne.s32.totalorder %s97, %s100
      %p106 = scmp.eq.s32.totalorder %s23, 0
      %p107 = por %p105, %p106
      %p108 = scmp.ne.s32.totalorder %s97, %s100
      %p109 = scmp.eq.s32.totalorder %s28, 1
      %p110 = por %p108, %p109
      %p111 = scmp.ne.s32.totalorder %s100, %s101
      %p112 = scmp.eq.s32.totalorder %s28, 0
      %p113 = por %p111, %p112
      %p114 = scmp.ne.s32.totalorder %s100, %s101
      %p115 = scmp.eq.s32.totalorder %s29, 1
      %p116 = por %p114, %p115
      %p118 = scmp.ne.s32.totalorder %s101, %s117
      %p119 = scmp.eq.s32.totalorder %s29, 0
      %p120 = por %p118, %p119
      %s121 = ssub.s32 %s31, %s38
      %p122 = scmp.eq.s32.totalorder %s121, 0
      %s124 = sadd.s32 %s123, 1
      %s125 = scalar_select %p122, %s123, %s124
      %p128 = pneg %p122
      %p129 = scmp.eq.s32.totalorder %s23, 1
      %p130 = por %p128, %p129
      %p131 = scmp.ne.s32.totalorder %s123, %s126
      %p132 = scmp.eq.s32.totalorder %s23, 0
      %p133 = por %p131, %p132
      %p134 = scmp.ne.s32.totalorder %s123, %s126
      %p135 = scmp.eq.s32.totalorder %s28, 1
      %p136 = por %p134, %p135
      %p137 = scmp.ne.s32.totalorder %s126, %s127
      %p138 = scmp.eq.s32.totalorder %s28, 0
      %p139 = por %p137, %p138
      %p140 = scmp.ne.s32.totalorder %s126, %s127
      %p141 = scmp.eq.s32.totalorder %s29, 1
      %p142 = por %p140, %p141
      %p144 = scmp.ne.s32.totalorder %s127, %s143
      %p145 = scmp.eq.s32.totalorder %s29, 0
      %p146 = por %p144, %p145
      %s147 = ssub.s32 %s31, %s38
      %p148 = scmp.eq.s32.totalorder %s147, 0
      %s150 = sadd.s32 %s149, 1
      %s151 = scalar_select %p148, %s149, %s150
      %p154 = pneg %p148
      %p155 = scmp.eq.s32.totalorder %s23, 1
      %p156 = por %p154, %p155
      %p157 = scmp.ne.s32.totalorder %s149, %s152
      %p158 = scmp.eq.s32.totalorder %s23, 0
      %p159 = por %p157, %p158
      %p160 = scmp.ne.s32.totalorder %s149, %s152
      %p161 = scmp.eq.s32.totalorder %s28, 1
      %p162 = por %p160, %p161
      %p163 = scmp.ne.s32.totalorder %s152, %s153
      %p164 = scmp.eq.s32.totalorder %s28, 0
      %p165 = por %p163, %p164
      %p166 = scmp.ne.s32.totalorder %s152, %s153
      %p167 = scmp.eq.s32.totalorder %s29, 1
      %p168 = por %p166, %p167
      %p170 = scmp.ne.s32.totalorder %s153, %s169
      %p171 = scmp.eq.s32.totalorder %s29, 0
      %p172 = por %p170, %p171
      %s173 = ssub.s32 %s31, %s38
      %p174 = scmp.eq.s32.totalorder %s173, 0
      %s176 = sadd.s32 %s175, 1
      %s177 = scalar_select %p174, %s175, %s176
      %p180 = pneg %p174
      %p181 = scmp.eq.s32.totalorder %s23, 1
      %p182 = por %p180, %p181
      %p183 = scmp.ne.s32.totalorder %s175, %s178
      %p184 = scmp.eq.s32.totalorder %s23, 0
      %p185 = por %p183, %p184
      %p186 = scmp.ne.s32.totalorder %s175, %s178
      %p187 = scmp.eq.s32.totalorder %s28, 1
      %p188 = por %p186, %p187
      %p189 = scmp.ne.s32.totalorder %s178, %s179
      %p190 = scmp.eq.s32.totalorder %s28, 0
      %p191 = por %p189, %p190
      %p192 = scmp.ne.s32.totalorder %s178, %s179
      %p193 = scmp.eq.s32.totalorder %s29, 1
      %p194 = por %p192, %p193
      %p196 = scmp.ne.s32.totalorder %s179, %s195
      %p197 = scmp.eq.s32.totalorder %s29, 0
      %p198 = por %p196, %p197
      %s199 = ssub.s32 %s31, %s38
      %p200 = scmp.eq.s32.totalorder %s199, 0
      %s202 = sadd.s32 %s201, 1
      %s203 = scalar_select %p200, %s201, %s202
      %p206 = pneg %p200
      %p207 = scmp.eq.s32.totalorder %s23, 1
      %p208 = por %p206, %p207
      %p209 = scmp.ne.s32.totalorder %s201, %s204
      %p210 = scmp.eq.s32.totalorder %s23, 0
      %p211 = por %p209, %p210
      %p212 = scmp.ne.s32.totalorder %s201, %s204
      %p213 = scmp.eq.s32.totalorder %s28, 1
      %p214 = por %p212, %p213
      %p215 = scmp.ne.s32.totalorder %s204, %s205
      %p216 = scmp.eq.s32.totalorder %s28, 0
      %p217 = por %p215, %p216
      %p218 = scmp.ne.s32.totalorder %s204, %s205
      %p219 = scmp.eq.s32.totalorder %s29, 1
      %p220 = por %p218, %p219
      %p222 = scmp.ne.s32.totalorder %s205, %s221
      %p223 = scmp.eq.s32.totalorder %s29, 0
      %p224 = por %p222, %p223
      %s225 = ssub.s32 %s31, %s38
      %p226 = scmp.eq.s32.totalorder %s225, 0
      %s228 = sadd.s32 %s227, 1
      %s229 = scalar_select %p226, %s227, %s228
      %p232 = pneg %p226
      %p233 = scmp.eq.s32.totalorder %s23, 1
      %p234 = por %p232, %p233
      %p235 = scmp.ne.s32.totalorder %s227, %s230
      %p236 = scmp.eq.s32.totalorder %s23, 0
      %p237 = por %p235, %p236
      %p238 = scmp.ne.s32.totalorder %s227, %s230
      %p239 = scmp.eq.s32.totalorder %s28, 1
      %p240 = por %p238, %p239
      %p241 = scmp.ne.s32.totalorder %s230, %s231
      %p242 = scmp.eq.s32.totalorder %s28, 0
      %p243 = por %p241, %p242
      %p244 = scmp.ne.s32.totalorder %s230, %s231
      %p245 = scmp.eq.s32.totalorder %s29, 1
      %p246 = por %p244, %p245
      %p248 = scmp.ne.s32.totalorder %s231, %s247
      %p249 = scmp.eq.s32.totalorder %s29, 0
      %p250 = por %p248, %p249
      %s251 = ssub.s32 %s31, %s38
      %p252 = scmp.eq.s32.totalorder %s251, 0
      %s254 = sadd.s32 %s253, 1
      %s255 = scalar_select %p252, %s253, %s254
      %p258 = pneg %p252
      %p259 = scmp.eq.s32.totalorder %s23, 1
      %p260 = por %p258, %p259
      %p261 = scmp.ne.s32.totalorder %s253, %s256
      %p262 = scmp.eq.s32.totalorder %s23, 0
      %p263 = por %p261, %p262
      %p264 = scmp.ne.s32.totalorder %s253, %s256
      %p265 = scmp.eq.s32.totalorder %s28, 1
      %p266 = por %p264, %p265
      %p267 = scmp.ne.s32.totalorder %s256, %s257
      %p268 = scmp.eq.s32.totalorder %s28, 0
      %p269 = por %p267, %p268
      %p270 = scmp.ne.s32.totalorder %s256, %s257
      %p271 = scmp.eq.s32.totalorder %s29, 1
      %p272 = por %p270, %p271
      %p274 = scmp.ne.s32.totalorder %s257, %s273
      %p275 = scmp.eq.s32.totalorder %s29, 0
      %p276 = por %p274, %p275
      %s277 = ssub.s32 %s31, %s38
      %p278 = scmp.eq.s32.totalorder %s277, 0
      %s280 = sadd.s32 %s279, 1
      %s281 = scalar_select %p278, %s279, %s280
      %p284 = pneg %p278
      %p285 = scmp.eq.s32.totalorder %s23, 1
      %p286 = por %p284, %p285
      %p287 = scmp.ne.s32.totalorder %s279, %s282
      %p288 = scmp.eq.s32.totalorder %s23, 0
      %p289 = por %p287, %p288
      %p290 = scmp.ne.s32.totalorder %s279, %s282
      %p291 = scmp.eq.s32.totalorder %s28, 1
      %p292 = por %p290, %p291
      %p293 = scmp.ne.s32.totalorder %s282, %s283
      %p294 = scmp.eq.s32.totalorder %s28, 0
      %p295 = por %p293, %p294
      %p296 = scmp.ne.s32.totalorder %s282, %s283
      %p297 = scmp.eq.s32.totalorder %s29, 1
      %p298 = por %p296, %p297
      %p300 = scmp.ne.s32.totalorder %s283, %s299
      %p301 = scmp.eq.s32.totalorder %s29, 0
      %p302 = por %p300, %p301
      %s303 = ssub.s32 %s31, %s38
      %p304 = scmp.eq.s32.totalorder %s303, 0
      %s306 = sadd.s32 %s305, 1
      %s307 = scalar_select %p304, %s305, %s306
      %p310 = pneg %p304
      %p311 = scmp.eq.s32.totalorder %s23, 1
      %p312 = por %p310, %p311
      %p313 = scmp.ne.s32.totalorder %s305, %s308
      %p314 = scmp.eq.s32.totalorder %s23, 0
      %p315 = por %p313, %p314
      %p316 = scmp.ne.s32.totalorder %s305, %s308
      %p317 = scmp.eq.s32.totalorder %s28, 1
      %p318 = por %p316, %p317
      %p319 = scmp.ne.s32.totalorder %s308, %s309
      %p320 = scmp.eq.s32.totalorder %s28, 0
      %p321 = por %p319, %p320
      %p322 = scmp.ne.s32.totalorder %s308, %s309
      %p323 = scmp.eq.s32.totalorder %s29, 1
      %p324 = por %p322, %p323
      %p326 = scmp.ne.s32.totalorder %s309, %s325
      %p327 = scmp.eq.s32.totalorder %s29, 0
      %p328 = por %p326, %p327
      %s329 = ssub.s32 %s31, %s38
      %p330 = scmp.eq.s32.totalorder %s329, 0
      %s332 = sadd.s32 %s331, 1
      %s333 = scalar_select %p330, %s331, %s332
      %p336 = pneg %p330
      %p337 = scmp.eq.s32.totalorder %s23, 1
      %p338 = por %p336, %p337
      %p339 = scmp.ne.s32.totalorder %s331, %s334
      %p340 = scmp.eq.s32.totalorder %s23, 0
      %p341 = por %p339, %p340
      %p342 = scmp.ne.s32.totalorder %s331, %s334
      %p343 = scmp.eq.s32.totalorder %s28, 1
      %p344 = por %p342, %p343
      %p345 = scmp.ne.s32.totalorder %s334, %s335
      %p346 = scmp.eq.s32.totalorder %s28, 0
      %p347 = por %p345, %p346
      %p348 = scmp.ne.s32.totalorder %s334, %s335
      %p349 = scmp.eq.s32.totalorder %s29, 1
      %p350 = por %p348, %p349
      %p352 = scmp.ne.s32.totalorder %s335, %s351
      %p353 = scmp.eq.s32.totalorder %s29, 0
      %p354 = por %p352, %p353
      %s355 = ssub.s32 %s31, %s38
      %p356 = scmp.eq.s32.totalorder %s355, 0
      %s358 = sadd.s32 %s357, 1
      %s359 = scalar_select %p356, %s357, %s358
      %p362 = pneg %p356
      %p363 = scmp.eq.s32.totalorder %s23, 1
      %p364 = por %p362, %p363
      %p365 = scmp.ne.s32.totalorder %s357, %s360
      %p366 = scmp.eq.s32.totalorder %s23, 0
      %p367 = por %p365, %p366
      %p368 = scmp.ne.s32.totalorder %s357, %s360
      %p369 = scmp.eq.s32.totalorder %s28, 1
      %p370 = por %p368, %p369
      %p371 = scmp.ne.s32.totalorder %s360, %s361
      %p372 = scmp.eq.s32.totalorder %s28, 0
      %p373 = por %p371, %p372
      %p374 = scmp.ne.s32.totalorder %s360, %s361
      %p375 = scmp.eq.s32.totalorder %s29, 1
      %p376 = por %p374, %p375
      %p378 = scmp.ne.s32.totalorder %s361, %s377
      %p379 = scmp.eq.s32.totalorder %s29, 0
      %p380 = por %p378, %p379
      %s381 = ssub.s32 %s31, %s38
      %p382 = scmp.eq.s32.totalorder %s381, 0
      %s384 = sadd.s32 %s383, 1
      %s385 = scalar_select %p382, %s383, %s384
      %p388 = pneg %p382
      %p389 = scmp.eq.s32.totalorder %s23, 1
      %p390 = por %p388, %p389
      %p391 = scmp.ne.s32.totalorder %s383, %s386
      %p392 = scmp.eq.s32.totalorder %s23, 0
      %p393 = por %p391, %p392
      %p394 = scmp.ne.s32.totalorder %s383, %s386
      %p395 = scmp.eq.s32.totalorder %s28, 1
      %p396 = por %p394, %p395
      %p397 = scmp.ne.s32.totalorder %s386, %s387
      %p398 = scmp.eq.s32.totalorder %s28, 0
      %p399 = por %p397, %p398
      %p400 = scmp.ne.s32.totalorder %s386, %s387
      %p401 = scmp.eq.s32.totalorder %s29, 1
      %p402 = por %p400, %p401
      %p404 = scmp.ne.s32.totalorder %s387, %s403
      %p405 = scmp.eq.s32.totalorder %s29, 0
      %p406 = por %p404, %p405
      %s407 = ssub.s32 %s30, %s42
      %p408 = scmp.eq.s32.totalorder %s407, 0
      %s410 = sadd.s32 %s409, 1
      %s411 = scalar_select %p408, %s409, %s410
      %p414 = pneg %p408
      %p415 = scmp.eq.s32.totalorder %s23, 1
      %p416 = por %p414, %p415
      %p417 = scmp.ne.s32.totalorder %s409, %s412
      %p418 = scmp.eq.s32.totalorder %s23, 0
      %p419 = por %p417, %p418
      %p420 = scmp.ne.s32.totalorder %s409, %s412
      %p421 = scmp.eq.s32.totalorder %s28, 1
      %p422 = por %p420, %p421
      %p423 = scmp.ne.s32.totalorder %s412, %s413
      %p424 = scmp.eq.s32.totalorder %s28, 0
      %p425 = por %p423, %p424
      %p426 = scmp.ne.s32.totalorder %s412, %s413
      %p427 = scmp.eq.s32.totalorder %s29, 1
      %p428 = por %p426, %p427
      %p430 = scmp.ne.s32.totalorder %s413, %s429
      %p431 = scmp.eq.s32.totalorder %s29, 0
      %p432 = por %p430, %p431
      %p433 = scmp.le.s32.totalorder 1, %s23
      %p434 = scmp.lt.s32.totalorder %s23, 3
      %p435 = pnand %p433, %p434
      %p436 = pneg %p435
      // Predicated region
      $region9: #{tpu_custom_call.1} parent=5 // pred_check
        _
      $region10: #{tpu_custom_call.1} parent=5 // pred_check_branch
        %438 = sbr.rel (%p435) target = $region12
      $region11: #{tpu_custom_call.1} parent=5 // pred_region
        %s439 = ssub.s32 %s23, 1
        // Predicated region
        $region13: #{tpu_custom_call.1} parent=11 // pred_check
          %p440 = pneg %p61
        $region14: #{tpu_custom_call.1} parent=11 // pred_check_branch
          %442 = sbr.rel (%p440) target = $region16
        $region15: #{tpu_custom_call.1} parent=11 // pred_region
          %s443 = smul.u32 2, %s32
          %s445 = ssub.s32 32, 32
          %446 = vsyncadd [#allocation4], %s445
          %s447 = smul.addr %s443, 16
          %s448 = scalar_lea.hbm %s0, %s447
          %s449 = sshll.u32 [#allocation3], 4
          %s450 = int_to_ptr.vmem [resolvable:$true] %s449
          %455 = dma.hbm_to_vmem [thread:$0]  %s448, 32, %s450, [#allocation4], 16, 16, 1
        $region16: #{tpu_custom_call.1} parent=11 // pred_fallthru
          _
        // Predicated region
        $region17: #{tpu_custom_call.1} parent=11 // pred_check
          %p456 = pneg %p87
        $region18: #{tpu_custom_call.1} parent=11 // pred_check_branch
          %458 = sbr.rel (%p456) target = $region20
        $region19: #{tpu_custom_call.1} parent=11 // pred_region
          %s459 = smul.u32 2, %s32
          %s461 = ssub.s32 256, 256
          %462 = vsyncadd [#allocation7], %s461
          %s463 = smul.addr %s459, 128
          %s464 = scalar_lea.hbm %s1, %s463
          %s465 = sshll.u32 [#allocation6], 4
          %s466 = int_to_ptr.vmem [resolvable:$true] %s465
          %471 = dma.hbm_to_vmem [thread:$0]  %s464, 256, %s466, [#allocation7], 128, 128, 8
        $region20: #{tpu_custom_call.1} parent=11 // pred_fallthru
          _
      $region12: #{tpu_custom_call.1} parent=5 // pred_fallthru
        _
      %p472 = scmp.lt.s32.totalorder %s23, 2
      // Predicated region
      $region21: #{tpu_custom_call.1} parent=5 // pred_check
        %p473 = pneg %p472
      $region22: #{tpu_custom_call.1} parent=5 // pred_check_branch
        %475 = sbr.rel (%p473) target = $region24
      $region23: #{tpu_custom_call.1} parent=5 // pred_region
        // Predicated region
        $region25: #{tpu_custom_call.1} parent=23 // pred_check
          %p476 = pneg %p107
        $region26: #{tpu_custom_call.1} parent=23 // pred_check_branch
          %478 = sbr.rel (%p476) target = $region28
        $region27: #{tpu_custom_call.1} parent=23 // pred_region
          %s479 = sand.u32 %s23, 1
          %s480 = scalar_lea.sflag [#allocation4], %s479
          %s481 = sand.u32 %s97, 1
          %s482 = scalar_lea.vmem [#allocation8], %s481
          %s484 = ssub.s32 16, 16
          %485 = vsyncadd %s480, %s484
          %s486 = smul.addr %s31, 16
          %s487 = scalar_lea.hbm %s2, %s486
          %s489 = sshll.u32 %s482, 4
          %s490 = int_to_ptr.vmem [resolvable:$true] %s489
          %492 = dma.hbm_to_vmem [thread:$0]  %s487, 16, %s490, %s480
        $region28: #{tpu_custom_call.1} parent=23 // pred_fallthru
          _
        // Predicated region
        $region29: #{tpu_custom_call.1} parent=23 // pred_check
          %p493 = pneg %p133
        $region30: #{tpu_custom_call.1} parent=23 // pred_check_branch
          %495 = sbr.rel (%p493) target = $region32
        $region31: #{tpu_custom_call.1} parent=23 // pred_region
          %s496 = sand.u32 %s23, 1
          %s497 = scalar_lea.sflag [#allocation4], %s496
          %s498 = sand.u32 %s123, 1
          %s499 = scalar_lea.vmem [#allocation9], %s498
          %s501 = ssub.s32 16, 16
          %502 = vsyncadd %s497, %s501
          %s503 = smul.addr %s31, 16
          %s504 = scalar_lea.hbm %s3, %s503
          %s506 = sshll.u32 %s499, 4
          %s507 = int_to_ptr.vmem [resolvable:$true] %s506
          %509 = dma.hbm_to_vmem [thread:$0]  %s504, 16, %s507, %s497
        $region32: #{tpu_custom_call.1} parent=23 // pred_fallthru
          _
        // Predicated region
        $region33: #{tpu_custom_call.1} parent=23 // pred_check
          %p510 = pneg %p159
        $region34: #{tpu_custom_call.1} parent=23 // pred_check_branch
          %512 = sbr.rel (%p510) target = $region36
        $region35: #{tpu_custom_call.1} parent=23 // pred_region
          %s513 = sand.u32 %s23, 1
          %s514 = scalar_lea.sflag [#allocation4], %s513
          %s515 = sand.u32 %s149, 1
          %s516 = smul.addr %s515, 16
          %s517 = scalar_lea.vmem [#allocation10], %s516
          %s519 = ssub.s32 256, 256
          %520 = vsyncadd %s514, %s519
          %s521 = smul.addr %s31, 4
          %s522 = smul.addr %s521, 64
          %s523 = scalar_lea.hbm %s4, %s522
          %s524 = sshll.u32 %s517, 4
          %s525 = int_to_ptr.vmem [resolvable:$true] %s524
          %530 = dma.hbm_to_vmem [thread:$0]  %s523, 256, %s525, %s514, 64, 64, 4
        $region36: #{tpu_custom_call.1} parent=23 // pred_fallthru
          _
        // Predicated region
        $region37: #{tpu_custom_call.1} parent=23 // pred_check
          %p531 = pneg %p185
        $region38: #{tpu_custom_call.1} parent=23 // pred_check_branch
          %533 = sbr.rel (%p531) target = $region40
        $region39: #{tpu_custom_call.1} parent=23 // pred_region
          %s534 = sand.u32 %s23, 1
          %s535 = scalar_lea.sflag [#allocation4], %s534
          %s536 = sand.u32 %s175, 1
          %s537 = scalar_lea.vmem [#allocation11], %s536
          %s539 = ssub.s32 16, 16
          %540 = vsyncadd %s535, %s539
          %s541 = smul.addr %s31, 16
          %s542 = scalar_lea.hbm %s5, %s541
          %s544 = sshll.u32 %s537, 4
          %s545 = int_to_ptr.vmem [resolvable:$true] %s544
          %547 = dma.hbm_to_vmem [thread:$0]  %s542, 16, %s545, %s535
        $region40: #{tpu_custom_call.1} parent=23 // pred_fallthru
          _
        // Predicated region
        $region41: #{tpu_custom_call.1} parent=23 // pred_check
          %p548 = pneg %p211
        $region42: #{tpu_custom_call.1} parent=23 // pred_check_branch
          %550 = sbr.rel (%p548) target = $region44
        $region43: #{tpu_custom_call.1} parent=23 // pred_region
          %s551 = sand.u32 %s23, 1
          %s552 = scalar_lea.sflag [#allocation4], %s551
          %s553 = sand.u32 %s201, 1
          %s554 = smul.addr %s553, 16
          %s555 = scalar_lea.vmem [#allocation12], %s554
          %s557 = ssub.s32 256, 256
          %558 = vsyncadd %s552, %s557
          %s559 = smul.addr %s31, 4
          %s560 = smul.addr %s559, 64
          %s561 = scalar_lea.hbm %s6, %s560
          %s562 = sshll.u32 %s555, 4
          %s563 = int_to_ptr.vmem [resolvable:$true] %s562
          %568 = dma.hbm_to_vmem [thread:$0]  %s561, 256, %s563, %s552, 64, 64, 4
        $region44: #{tpu_custom_call.1} parent=23 // pred_fallthru
          _
        // Predicated region
        $region45: #{tpu_custom_call.1} parent=23 // pred_check
          %p569 = pneg %p237
        $region46: #{tpu_custom_call.1} parent=23 // pred_check_branch
          %571 = sbr.rel (%p569) target = $region48
        $region47: #{tpu_custom_call.1} parent=23 // pred_region
          %s572 = sand.u32 %s23, 1
          %s573 = scalar_lea.sflag [#allocation4], %s572
          %s574 = sand.u32 %s227, 1
          %s575 = scalar_lea.vmem [#allocation13], %s574
          %s577 = ssub.s32 16, 16
          %578 = vsyncadd %s573, %s577
          %s579 = smul.addr %s31, 16
          %s580 = scalar_lea.hbm %s7, %s579
          %s582 = sshll.u32 %s575, 4
          %s583 = int_to_ptr.vmem [resolvable:$true] %s582
          %585 = dma.hbm_to_vmem [thread:$0]  %s580, 16, %s583, %s573
        $region48: #{tpu_custom_call.1} parent=23 // pred_fallthru
          _
        // Predicated region
        $region49: #{tpu_custom_call.1} parent=23 // pred_check
          %p586 = pneg %p263
        $region50: #{tpu_custom_call.1} parent=23 // pred_check_branch
          %588 = sbr.rel (%p586) target = $region52
        $region51: #{tpu_custom_call.1} parent=23 // pred_region
          %s589 = sand.u32 %s23, 1
          %s590 = scalar_lea.sflag [#allocation4], %s589
          %s591 = sand.u32 %s253, 1
          %s592 = scalar_lea.vmem [#allocation14], %s591
          %s594 = ssub.s32 16, 16
          %595 = vsyncadd %s590, %s594
          %s596 = smul.addr %s31, 16
          %s597 = scalar_lea.hbm %s8, %s596
          %s599 = sshll.u32 %s592, 4
          %s600 = int_to_ptr.vmem [resolvable:$true] %s599
          %602 = dma.hbm_to_vmem [thread:$0]  %s597, 16, %s600, %s590
        $region52: #{tpu_custom_call.1} parent=23 // pred_fallthru
          _
        // Predicated region
        $region53: #{tpu_custom_call.1} parent=23 // pred_check
          %p603 = pneg %p289
        $region54: #{tpu_custom_call.1} parent=23 // pred_check_branch
          %605 = sbr.rel (%p603) target = $region56
        $region55: #{tpu_custom_call.1} parent=23 // pred_region
          %s606 = sand.u32 %s23, 1
          %s607 = scalar_lea.sflag [#allocation4], %s606
          %s608 = sand.u32 %s279, 1
          %s609 = scalar_lea.vmem [#allocation15], %s608
          %s611 = ssub.s32 16, 16
          %612 = vsyncadd %s607, %s611
          %s613 = smul.addr %s31, 16
          %s614 = scalar_lea.hbm %s9, %s613
          %s616 = sshll.u32 %s609, 4
          %s617 = int_to_ptr.vmem [resolvable:$true] %s616
          %619 = dma.hbm_to_vmem [thread:$0]  %s614, 16, %s617, %s607
        $region56: #{tpu_custom_call.1} parent=23 // pred_fallthru
          _
        // Predicated region
        $region57: #{tpu_custom_call.1} parent=23 // pred_check
          %p620 = pneg %p315
        $region58: #{tpu_custom_call.1} parent=23 // pred_check_branch
          %622 = sbr.rel (%p620) target = $region60
        $region59: #{tpu_custom_call.1} parent=23 // pred_region
          %s623 = sand.u32 %s23, 1
          %s624 = scalar_lea.sflag [#allocation4], %s623
          %s625 = sand.u32 %s305, 1
          %s626 = smul.addr %s625, 16
          %s627 = scalar_lea.vmem [#allocation16], %s626
          %s629 = ssub.s32 256, 256
          %630 = vsyncadd %s624, %s629
          %s631 = smul.addr %s31, 4
          %s632 = smul.addr %s631, 64
          %s633 = scalar_lea.hbm %s10, %s632
          %s634 = sshll.u32 %s627, 4
          %s635 = int_to_ptr.vmem [resolvable:$true] %s634
          %640 = dma.hbm_to_vmem [thread:$0]  %s633, 256, %s635, %s624, 64, 64, 4
        $region60: #{tpu_custom_call.1} parent=23 // pred_fallthru
          _
        // Predicated region
        $region61: #{tpu_custom_call.1} parent=23 // pred_check
          %p641 = pneg %p341
        $region62: #{tpu_custom_call.1} parent=23 // pred_check_branch
          %643 = sbr.rel (%p641) target = $region64
        $region63: #{tpu_custom_call.1} parent=23 // pred_region
          %s644 = sand.u32 %s23, 1
          %s645 = scalar_lea.sflag [#allocation4], %s644
          %s646 = sand.u32 %s331, 1
          %s647 = scalar_lea.vmem [#allocation17], %s646
          %s649 = ssub.s32 16, 16
          %650 = vsyncadd %s645, %s649
          %s651 = smul.addr %s31, 16
          %s652 = scalar_lea.hbm %s11, %s651
          %s654 = sshll.u32 %s647, 4
          %s655 = int_to_ptr.vmem [resolvable:$true] %s654
          %657 = dma.hbm_to_vmem [thread:$0]  %s652, 16, %s655, %s645
        $region64: #{tpu_custom_call.1} parent=23 // pred_fallthru
          _
        // Predicated region
        $region65: #{tpu_custom_call.1} parent=23 // pred_check
          %p658 = pneg %p367
        $region66: #{tpu_custom_call.1} parent=23 // pred_check_branch
          %660 = sbr.rel (%p658) target = $region68
        $region67: #{tpu_custom_call.1} parent=23 // pred_region
          %s661 = sand.u32 %s23, 1
          %s662 = scalar_lea.sflag [#allocation4], %s661
          %s663 = sand.u32 %s357, 1
          %s664 = smul.addr %s663, 32
          %s665 = scalar_lea.vmem [#allocation18], %s664
          %s667 = ssub.s32 512, 512
          %668 = vsyncadd %s662, %s667
          %s669 = smul.addr %s31, 8
          %s670 = smul.addr %s669, 64
          %s671 = scalar_lea.hbm %s12, %s670
          %s672 = sshll.u32 %s665, 4
          %s673 = int_to_ptr.vmem [resolvable:$true] %s672
          %678 = dma.hbm_to_vmem [thread:$0]  %s671, 512, %s673, %s662, 64, 64, 4
        $region68: #{tpu_custom_call.1} parent=23 // pred_fallthru
          _
        // Predicated region
        $region69: #{tpu_custom_call.1} parent=23 // pred_check
          %p679 = pneg %p393
        $region70: #{tpu_custom_call.1} parent=23 // pred_check_branch
          %681 = sbr.rel (%p679) target = $region72
        $region71: #{tpu_custom_call.1} parent=23 // pred_region
          %s682 = sand.u32 %s23, 1
          %s683 = scalar_lea.sflag [#allocation4], %s682
          %s684 = sand.u32 %s383, 1
          %s685 = scalar_lea.vmem [#allocation19], %s684
          %s687 = ssub.s32 16, 16
          %688 = vsyncadd %s683, %s687
          %s689 = smul.addr %s31, 16
          %s690 = scalar_lea.hbm %s13, %s689
          %s692 = sshll.u32 %s685, 4
          %s693 = int_to_ptr.vmem [resolvable:$true] %s692
          %695 = dma.hbm_to_vmem [thread:$0]  %s690, 16, %s693, %s683
        $region72: #{tpu_custom_call.1} parent=23 // pred_fallthru
          _
      $region24: #{tpu_custom_call.1} parent=5 // pred_fallthru
        _
      %p696 = scmp.le.s32.totalorder 1, %s23
      %p697 = scmp.lt.s32.totalorder %s23, 3
      %p698 = pnand %p696, %p697
      %p699 = pneg %p698
      // Predicated region
      $region73: #{tpu_custom_call.1} parent=5 // pred_check
        _
      $region74: #{tpu_custom_call.1} parent=5 // pred_check_branch
        %701 = sbr.rel (%p698) target = $region76
      $region75: #{tpu_custom_call.1} parent=5 // pred_region
        %s702 = ssub.s32 %s23, 1
        // Predicated region
        $region77: #{tpu_custom_call.1} parent=75 // pred_check
          %p703 = pneg %p61
        $region78: #{tpu_custom_call.1} parent=75 // pred_check_branch
          %705 = sbr.rel (%p703) target = $region80
        $region79: #{tpu_custom_call.1} parent=75 // pred_region
          %706 = dma.done [#allocation4], 32
        $region80: #{tpu_custom_call.1} parent=75 // pred_fallthru
          _
        // Predicated region
        $region81: #{tpu_custom_call.1} parent=75 // pred_check
          %p707 = pneg %p87
        $region82: #{tpu_custom_call.1} parent=75 // pred_check_branch
          %709 = sbr.rel (%p707) target = $region84
        $region83: #{tpu_custom_call.1} parent=75 // pred_region
          %710 = dma.done [#allocation7], 256
        $region84: #{tpu_custom_call.1} parent=75 // pred_fallthru
          _
        %s711 = sand.u32 %s28, 1
        %s712 = scalar_lea.sflag [#allocation4], %s711
        %s713 = sand.u32 %s100, 1
        %s714 = scalar_lea.vmem [#allocation8], %s713
        // Predicated region
        $region85: #{tpu_custom_call.1} parent=75 // pred_check
          %p715 = pneg %p113
        $region86: #{tpu_custom_call.1} parent=75 // pred_check_branch
          %717 = sbr.rel (%p715) target = $region88
        $region87: #{tpu_custom_call.1} parent=75 // pred_region
          %718 = dma.done %s712, 16
        $region88: #{tpu_custom_call.1} parent=75 // pred_fallthru
          _
        %s719 = sand.u32 %s28, 1
        %s720 = scalar_lea.sflag [#allocation4], %s719
        %s721 = sand.u32 %s126, 1
        %s722 = scalar_lea.vmem [#allocation9], %s721
        // Predicated region
        $region89: #{tpu_custom_call.1} parent=75 // pred_check
          %p723 = pneg %p139
        $region90: #{tpu_custom_call.1} parent=75 // pred_check_branch
          %725 = sbr.rel (%p723) target = $region92
        $region91: #{tpu_custom_call.1} parent=75 // pred_region
          %726 = dma.done %s720, 16
        $region92: #{tpu_custom_call.1} parent=75 // pred_fallthru
          _
        %s727 = sand.u32 %s28, 1
        %s728 = scalar_lea.sflag [#allocation4], %s727
        %s729 = sand.u32 %s152, 1
        %s730 = smul.addr %s729, 16
        %s731 = scalar_lea.vmem [#allocation10], %s730
        // Predicated region
        $region93: #{tpu_custom_call.1} parent=75 // pred_check
          %p732 = pneg %p165
        $region94: #{tpu_custom_call.1} parent=75 // pred_check_branch
          %734 = sbr.rel (%p732) target = $region96
        $region95: #{tpu_custom_call.1} parent=75 // pred_region
          %735 = dma.done %s728, 256
        $region96: #{tpu_custom_call.1} parent=75 // pred_fallthru
          _
        %s736 = sand.u32 %s28, 1
        %s737 = scalar_lea.sflag [#allocation4], %s736
        %s738 = sand.u32 %s178, 1
        %s739 = scalar_lea.vmem [#allocation11], %s738
        // Predicated region
        $region97: #{tpu_custom_call.1} parent=75 // pred_check
          %p740 = pneg %p191
        $region98: #{tpu_custom_call.1} parent=75 // pred_check_branch
          %742 = sbr.rel (%p740) target = $region100
        $region99: #{tpu_custom_call.1} parent=75 // pred_region
          %743 = dma.done %s737, 16
        $region100: #{tpu_custom_call.1} parent=75 // pred_fallthru
          _
        %s744 = sand.u32 %s28, 1
        %s745 = scalar_lea.sflag [#allocation4], %s744
        %s746 = sand.u32 %s204, 1
        %s747 = smul.addr %s746, 16
        %s748 = scalar_lea.vmem [#allocation12], %s747
        // Predicated region
        $region101: #{tpu_custom_call.1} parent=75 // pred_check
          %p749 = pneg %p217
        $region102: #{tpu_custom_call.1} parent=75 // pred_check_branch
          %751 = sbr.rel (%p749) target = $region104
        $region103: #{tpu_custom_call.1} parent=75 // pred_region
          %752 = dma.done %s745, 256
        $region104: #{tpu_custom_call.1} parent=75 // pred_fallthru
          _
        %s753 = sand.u32 %s28, 1
        %s754 = scalar_lea.sflag [#allocation4], %s753
        %s755 = sand.u32 %s230, 1
        %s756 = scalar_lea.vmem [#allocation13], %s755
        // Predicated region
        $region105: #{tpu_custom_call.1} parent=75 // pred_check
          %p757 = pneg %p243
        $region106: #{tpu_custom_call.1} parent=75 // pred_check_branch
          %759 = sbr.rel (%p757) target = $region108
        $region107: #{tpu_custom_call.1} parent=75 // pred_region
          %760 = dma.done %s754, 16
        $region108: #{tpu_custom_call.1} parent=75 // pred_fallthru
          _
        %s761 = sand.u32 %s28, 1
        %s762 = scalar_lea.sflag [#allocation4], %s761
        %s763 = sand.u32 %s256, 1
        %s764 = scalar_lea.vmem [#allocation14], %s763
        // Predicated region
        $region109: #{tpu_custom_call.1} parent=75 // pred_check
          %p765 = pneg %p269
        $region110: #{tpu_custom_call.1} parent=75 // pred_check_branch
          %767 = sbr.rel (%p765) target = $region112
        $region111: #{tpu_custom_call.1} parent=75 // pred_region
          %768 = dma.done %s762, 16
        $region112: #{tpu_custom_call.1} parent=75 // pred_fallthru
          _
        %s769 = sand.u32 %s28, 1
        %s770 = scalar_lea.sflag [#allocation4], %s769
        %s771 = sand.u32 %s282, 1
        %s772 = scalar_lea.vmem [#allocation15], %s771
        // Predicated region
        $region113: #{tpu_custom_call.1} parent=75 // pred_check
          %p773 = pneg %p295
        $region114: #{tpu_custom_call.1} parent=75 // pred_check_branch
          %775 = sbr.rel (%p773) target = $region116
        $region115: #{tpu_custom_call.1} parent=75 // pred_region
          %776 = dma.done %s770, 16
        $region116: #{tpu_custom_call.1} parent=75 // pred_fallthru
          _
        %s777 = sand.u32 %s28, 1
        %s778 = scalar_lea.sflag [#allocation4], %s777
        %s779 = sand.u32 %s308, 1
        %s780 = smul.addr %s779, 16
        %s781 = scalar_lea.vmem [#allocation16], %s780
        // Predicated region
        $region117: #{tpu_custom_call.1} parent=75 // pred_check
          %p782 = pneg %p321
        $region118: #{tpu_custom_call.1} parent=75 // pred_check_branch
          %784 = sbr.rel (%p782) target = $region120
        $region119: #{tpu_custom_call.1} parent=75 // pred_region
          %785 = dma.done %s778, 256
        $region120: #{tpu_custom_call.1} parent=75 // pred_fallthru
          _
        %s786 = sand.u32 %s28, 1
        %s787 = scalar_lea.sflag [#allocation4], %s786
        %s788 = sand.u32 %s334, 1
        %s789 = scalar_lea.vmem [#allocation17], %s788
        // Predicated region
        $region121: #{tpu_custom_call.1} parent=75 // pred_check
          %p790 = pneg %p347
        $region122: #{tpu_custom_call.1} parent=75 // pred_check_branch
          %792 = sbr.rel (%p790) target = $region124
        $region123: #{tpu_custom_call.1} parent=75 // pred_region
          %793 = dma.done %s787, 16
        $region124: #{tpu_custom_call.1} parent=75 // pred_fallthru
          _
        %s794 = sand.u32 %s28, 1
        %s795 = scalar_lea.sflag [#allocation4], %s794
        %s796 = sand.u32 %s360, 1
        %s797 = smul.addr %s796, 32
        %s798 = scalar_lea.vmem [#allocation18], %s797
        // Predicated region
        $region125: #{tpu_custom_call.1} parent=75 // pred_check
          %p799 = pneg %p373
        $region126: #{tpu_custom_call.1} parent=75 // pred_check_branch
          %801 = sbr.rel (%p799) target = $region128
        $region127: #{tpu_custom_call.1} parent=75 // pred_region
          %802 = dma.done %s795, 512
        $region128: #{tpu_custom_call.1} parent=75 // pred_fallthru
          _
        %s803 = sand.u32 %s28, 1
        %s804 = scalar_lea.sflag [#allocation4], %s803
        %s805 = sand.u32 %s386, 1
        %s806 = scalar_lea.vmem [#allocation19], %s805
        // Predicated region
        $region129: #{tpu_custom_call.1} parent=75 // pred_check
          %p807 = pneg %p399
        $region130: #{tpu_custom_call.1} parent=75 // pred_check_branch
          %809 = sbr.rel (%p807) target = $region132
        $region131: #{tpu_custom_call.1} parent=75 // pred_region
          %810 = dma.done %s804, 16
        $region132: #{tpu_custom_call.1} parent=75 // pred_fallthru
          _
        %p811 = pneg %p61
        %p812 = pneg %p58
        %p813 = pneg %p87
        %p814 = pneg %p84
        %s815 = sand.u32 %s28, 1
        %s816 = scalar_lea.sflag [#allocation4], %s815
        %s817 = sand.u32 %s100, 1
        %s818 = scalar_lea.vmem [#allocation8], %s817
        %p819 = pneg %p113
        %p820 = pneg %p110
        %s821 = sand.u32 %s28, 1
        %s822 = scalar_lea.sflag [#allocation4], %s821
        %s823 = sand.u32 %s126, 1
        %s824 = scalar_lea.vmem [#allocation9], %s823
        %p825 = pneg %p139
        %p826 = pneg %p136
        %s827 = sand.u32 %s28, 1
        %s828 = scalar_lea.sflag [#allocation4], %s827
        %s829 = sand.u32 %s152, 1
        %s830 = smul.addr %s829, 16
        %s831 = scalar_lea.vmem [#allocation10], %s830
        %p832 = pneg %p165
        %p833 = pneg %p162
        %s834 = sand.u32 %s28, 1
        %s835 = scalar_lea.sflag [#allocation4], %s834
        %s836 = sand.u32 %s178, 1
        %s837 = scalar_lea.vmem [#allocation11], %s836
        %p838 = pneg %p191
        %p839 = pneg %p188
        %s840 = sand.u32 %s28, 1
        %s841 = scalar_lea.sflag [#allocation4], %s840
        %s842 = sand.u32 %s204, 1
        %s843 = smul.addr %s842, 16
        %s844 = scalar_lea.vmem [#allocation12], %s843
        %p845 = pneg %p217
        %p846 = pneg %p214
        %s847 = sand.u32 %s28, 1
        %s848 = scalar_lea.sflag [#allocation4], %s847
        %s849 = sand.u32 %s230, 1
        %s850 = scalar_lea.vmem [#allocation13], %s849
        %p851 = pneg %p243
        %p852 = pneg %p240
        %s853 = sand.u32 %s28, 1
        %s854 = scalar_lea.sflag [#allocation4], %s853
        %s855 = sand.u32 %s256, 1
        %s856 = scalar_lea.vmem [#allocation14], %s855
        %p857 = pneg %p269
        %p858 = pneg %p266
        %s859 = sand.u32 %s28, 1
        %s860 = scalar_lea.sflag [#allocation4], %s859
        %s861 = sand.u32 %s282, 1
        %s862 = scalar_lea.vmem [#allocation15], %s861
        %p863 = pneg %p295
        %p864 = pneg %p292
        %s865 = sand.u32 %s28, 1
        %s866 = scalar_lea.sflag [#allocation4], %s865
        %s867 = sand.u32 %s308, 1
        %s868 = smul.addr %s867, 16
        %s869 = scalar_lea.vmem [#allocation16], %s868
        %p870 = pneg %p321
        %p871 = pneg %p318
        %s872 = sand.u32 %s28, 1
        %s873 = scalar_lea.sflag [#allocation4], %s872
        %s874 = sand.u32 %s334, 1
        %s875 = scalar_lea.vmem [#allocation17], %s874
        %p876 = pneg %p347
        %p877 = pneg %p344
        %s878 = sand.u32 %s28, 1
        %s879 = scalar_lea.sflag [#allocation4], %s878
        %s880 = sand.u32 %s360, 1
        %s881 = smul.addr %s880, 32
        %s882 = scalar_lea.vmem [#allocation18], %s881
        %p883 = pneg %p373
        %p884 = pneg %p370
        %s885 = sand.u32 %s28, 1
        %s886 = scalar_lea.sflag [#allocation4], %s885
        %s887 = sand.u32 %s386, 1
        %s888 = scalar_lea.vmem [#allocation19], %s887
        %p889 = pneg %p399
        %p890 = pneg %p396
        %p891 = pneg %p425
        %p892 = pneg %p422
        %s893 = smul.u32 2, %s32
        %s894 = smul.u32 2, %s32
        %s895 = smul.u32 2, %s32
        %p897 = scmp.eq.s32.totalorder %s33, 0
        // Predicated region
        $region133: #{tpu_custom_call.1} parent=75 // pred_check
          %p898 = pneg %p897
        $region134: #{tpu_custom_call.1} parent=75 // pred_check_branch
          %900 = sbr.rel (%p898) target = $region136
        $region135: #{tpu_custom_call.1} parent=75 // pred_region
          %v901 = vld [vmem:[#allocation6] sm:$0xff]
          %v902 = vld [vmem:[#allocation6 + $0x8] sm:$0xff]
          %vm903 = vcmask 261120
          %904 = vst.msk [vmem:[#allocation20] sm:$0xff] %vm903, %v901
          %905 = vst.msk [vmem:[#allocation20 + $0x8] sm:$0xff] %vm903, %v902
        $region136: #{tpu_custom_call.1} parent=75 // pred_fallthru
          _
        %v906 = vld [vmem:[#allocation20] sm:$0xff]
        %v907 = vld [vmem:[#allocation20 + $0x8] sm:$0xff]
        %v908 = vld [vmem:[#allocation3] sm:$0x1]
        %v909 = vld [vmem:[#allocation3 + $0x1] sm:$0x1]
        %v910 = vld [vmem:[%s714] sm:$0x1]
        %v911 = vld [vmem:[%s722] sm:$0x1]
        %vm912 = vcmask 261120
        %v913 = vsel %vm912, %v906, 0.0
        %914 = vadd.xlane.f32.xlu0 %v913
        %v915 = vpop.xlane.xlu0 %914
        %v916 = vsel %vm912, %v907, 0.0
        %917 = vadd.xlane.f32.xlu0 %v916
        %v918 = vpop.xlane.xlu0 %917
        %v919 = vrcp.pop 32.0
        %v920 = vmul.f32 %v915, %v919
        %v921 = vmul.f32 %v918, %v919
        %v922 = vsub.f32 %v906, %v920
        %v923 = vsub.f32 %v907, %v921
        %v924 = vmul.f32 %v922, %v922
        %v925 = vmul.f32 %v923, %v923
        %v926 = vsel %vm912, %v924, 0.0
        %927 = vadd.xlane.f32.xlu0 %v926
        %v928 = vpop.xlane.xlu0 %927
        %v929 = vsel %vm912, %v925, 0.0
        %930 = vadd.xlane.f32.xlu0 %v929
        %v931 = vpop.xlane.xlu0 %930
        %v932 = vmul.f32 %v928, %v919
        %v933 = vmul.f32 %v931, %v919
        %v934 = vadd.f32 %v932, 1e-06
        %v935 = vadd.f32 %v933, 1e-06
        %v936 = vrsqrt.pop %v934
        %v937 = vrsqrt.pop %v935
        %v938 = vmul.f32 %v922, %v936
        %v939 = vmul.f32 %v923, %v937
        %v941 = vlaneseq
        %v942 = vshrl.u32 %v941, 7
        %v943 = vsub.s32 0, %v942
        %v944 = vrot.slane %v910, %v943
        %v946 = vmul.f32 %v938, %v944
        %v947 = vmul.f32 %v939, %v944
        %v949 = vlaneseq
        %v950 = vshrl.u32 %v949, 7
        %v951 = vsub.s32 0, %v950
        %v952 = vrot.slane %v911, %v951
        %v954 = vadd.f32 %v946, %v952
        %v955 = vadd.f32 %v947, %v952
        %v956 = vpack.c.bf16 %v955, %v954
        %v957 = vld [vmem:[%s731] sm:$0xf]
        %v958 = vld [vmem:[%s731 + $0x4] sm:$0xf]
        %v959 = vld [vmem:[%s731 + $0x8] sm:$0xf]
        %v960 = vld [vmem:[%s731 + $0xc] sm:$0xf]
        %v961 = vld [vmem:[%s739] sm:$0x1]
        %v963 = vlaneseq
        %v964 = vshrl.u32 %v963, 7
        %v965 = vsub.s32 0, %v964
        %v966 = vrot.slane %v961, %v965
        %v972 = vunpack.c.l.b16 %v957
        %v973 = vunpack.c.l.b16 %v958
        %v974 = vunpack.c.l.b16 %v959
        %v975 = vunpack.c.l.b16 %v960
        %v976 = vpack.c.b16 %v973, %v972
        %v977 = vpack.c.b16 %v975, %v974
        %v981 = vsel %vm912, %v956, 0
        %983 = vmatprep.subr.bf16.mxu0 0
        %984 = vmatpush1.bf16.msra.mxu0 %v976
        %985 = vmatprep.subr.bf16.mxu0 0
        %986 = vmatpush1.bf16.msra.mxu0 %v977
        %987 = vmatprep.subr.bf16.mxu0 0
        %988 = vmatpush1.bf16.msra.mxu0 0
        %989 = vmatprep.subr.bf16.mxu0 0
        %990 = vmatpush1.bf16.msra.mxu0 0
        %991 = vmatprep.subr.bf16.mxu0 0
        %992 = vmatpush1.bf16.msra.mxu0 0
        %993 = vmatprep.subr.bf16.mxu0 0
        %994 = vmatpush1.bf16.msra.mxu0 0
        %995 = vmatprep.subr.bf16.mxu0 0
        %996 = vmatpush1.bf16.msra.mxu0 0
        %997 = vmatprep.subr.bf16.mxu0 0
        %998 = vmatpush1.bf16.msra.mxu0 0
        %999 = vmatprep.subr.bf16.mxu0 0
        %1000 = vmatpush1.bf16.msra.mxu0 0
        %1001 = vmatprep.subr.bf16.mxu0 0
        %1002 = vmatpush1.bf16.msra.mxu0 0
        %1003 = vmatprep.subr.bf16.mxu0 0
        %1004 = vmatpush1.bf16.msra.mxu0 0
        %1005 = vmatprep.subr.bf16.mxu0 0
        %1006 = vmatpush1.bf16.msra.mxu0 0
        %1007 = vmatprep.subr.bf16.mxu0 0
        %1008 = vmatpush1.bf16.msra.mxu0 0
        %1009 = vmatprep.subr.bf16.mxu0 0
        %1010 = vmatpush1.bf16.msra.mxu0 0
        %1011 = vmatprep.subr.bf16.mxu0 0
        %1012 = vmatpush1.bf16.msra.mxu0 0
        %1013 = vmatprep.subr.bf16.mxu0 0
        %1014 = vmatpush1.bf16.msra.mxu0 0
        %1015 = vmatprep.mubr.bf16.mxu0 0
        %1016 = vmatmul.mubr.bf16.gmra.mrb[0].mxu0 %v981
        %v1017 = vpop.f32.mrb[0].mxu0
        %v1018 = vadd.f32 %v966, %v1017
        %v1019 = vpop.f32.mrb[0].mxu0
        %v1020 = vpop.f32.mrb[0].mxu0
        %v1021 = vadd.f32 %v966, %v1020
        %v1022 = vpop.f32.mrb[0].mxu0
        %1023 = vdwg.mxu0
        %v1024 = vpack.c.bf16 %v1018, %v1018
        %v1025 = vpack.c.bf16 %v1021, %v1021
        %v1028 = vlaneseq
        %v1029 = vshrl.u32 %v1028, 7
        %v1030 = vsub.s32 0, %v1029
        %v1031 = vrot.slane %v908, %v1030
        %v1032 = vlaneseq
        %v1033 = vshrl.u32 %v1032, 7
        %v1034 = vsub.s32 0, %v1033
        %v1035 = vrot.slane %v909, %v1034
        %1039 = vrot.lane.b32.xlu0 %v1024, 96
        %v1040 = vpop.permute.xlu0 %1039
        %vm1041 = vcmask 130048
        %v1043 = vsel %vm1041, %v1024, 0
        %v1046 = vsel %vm1041, %v1040, 0
        %1048 = vmatprep.subr.bf16.mxu0 0
        %1049 = vmatpush1.bf16.xpose.msra.mxu0 %v1046
        %1050 = vmatprep.subr.bf16.mxu0 0
        %1051 = vmatpush1.bf16.xpose.msra.mxu0 0
        %1052 = vmatprep.subr.bf16.mxu0 0
        %1053 = vmatpush1.bf16.xpose.msra.mxu0 0
        %1054 = vmatprep.subr.bf16.mxu0 0
        %1055 = vmatpush1.bf16.xpose.msra.mxu0 0
        %1056 = vmatprep.subr.bf16.mxu0 0
        %1057 = vmatpush1.bf16.xpose.msra.mxu0 0
        %1058 = vmatprep.subr.bf16.mxu0 0
        %1059 = vmatpush1.bf16.xpose.msra.mxu0 0
        %1060 = vmatprep.subr.bf16.mxu0 0
        %1061 = vmatpush1.bf16.xpose.msra.mxu0 0
        %1062 = vmatprep.subr.bf16.mxu0 0
        %1063 = vmatpush1.bf16.xpose.msra.mxu0 0
        %1064 = vmatprep.subr.bf16.mxu0 0
        %1065 = vmatpush1.bf16.xpose.msra.mxu0 0
        %1066 = vmatprep.subr.bf16.mxu0 0
        %1067 = vmatpush1.bf16.xpose.msra.mxu0 0
        %1068 = vmatprep.subr.bf16.mxu0 0
        %1069 = vmatpush1.bf16.xpose.msra.mxu0 0
        %1070 = vmatprep.subr.bf16.mxu0 0
        %1071 = vmatpush1.bf16.xpose.msra.mxu0 0
        %1072 = vmatprep.subr.bf16.mxu0 0
        %1073 = vmatpush1.bf16.xpose.msra.mxu0 0
        %1074 = vmatprep.subr.bf16.mxu0 0
        %1075 = vmatpush1.bf16.xpose.msra.mxu0 0
        %1076 = vmatprep.subr.bf16.mxu0 0
        %1077 = vmatpush1.bf16.xpose.msra.mxu0 0
        %1078 = vmatprep.subr.bf16.mxu0 0
        %1079 = vmatpush1.bf16.xpose.msra.mxu0 0
        %1080 = vmatprep.mubr.bf16.mxu0 0
        %1081 = vmatmul.mubr.bf16.gmra.mrb[0].mxu0 %v1043
        %v1082 = vpop.f32.mrb[0].mxu0
        %v1083 = vadd.f32 %v1031, %v1082
        %v1084 = vpop.f32.mrb[0].mxu0
        %v1085 = vpop.f32.mrb[0].mxu0
        %v1086 = vpop.f32.mrb[0].mxu0
        %1087 = vdwg.mxu0
        %1089 = vrot.lane.b32.xlu0 %v1025, 96
        %v1090 = vpop.permute.xlu0 %1089
        %v1092 = vsel %vm1041, %v1025, 0
        %v1095 = vsel %vm1041, %v1090, 0
        %1097 = vmatprep.subr.bf16.mxu0 0
        %1098 = vmatpush1.bf16.xpose.msra.mxu0 %v1095
        %1099 = vmatprep.subr.bf16.mxu0 0
        %1100 = vmatpush1.bf16.xpose.msra.mxu0 0
        %1101 = vmatprep.subr.bf16.mxu0 0
        %1102 = vmatpush1.bf16.xpose.msra.mxu0 0
        %1103 = vmatprep.subr.bf16.mxu0 0
        %1104 = vmatpush1.bf16.xpose.msra.mxu0 0
        %1105 = vmatprep.subr.bf16.mxu0 0
        %1106 = vmatpush1.bf16.xpose.msra.mxu0 0
        %1107 = vmatprep.subr.bf16.mxu0 0
        %1108 = vmatpush1.bf16.xpose.msra.mxu0 0
        %1109 = vmatprep.subr.bf16.mxu0 0
        %1110 = vmatpush1.bf16.xpose.msra.mxu0 0
        %1111 = vmatprep.subr.bf16.mxu0 0
        %1112 = vmatpush1.bf16.xpose.msra.mxu0 0
        %1113 = vmatprep.subr.bf16.mxu0 0
        %1114 = vmatpush1.bf16.xpose.msra.mxu0 0
        %1115 = vmatprep.subr.bf16.mxu0 0
        %1116 = vmatpush1.bf16.xpose.msra.mxu0 0
        %1117 = vmatprep.subr.bf16.mxu0 0
        %1118 = vmatpush1.bf16.xpose.msra.mxu0 0
        %1119 = vmatprep.subr.bf16.mxu0 0
        %1120 = vmatpush1.bf16.xpose.msra.mxu0 0
        %1121 = vmatprep.subr.bf16.mxu0 0
        %1122 = vmatpush1.bf16.xpose.msra.mxu0 0
        %1123 = vmatprep.subr.bf16.mxu0 0
        %1124 = vmatpush1.bf16.xpose.msra.mxu0 0
        %1125 = vmatprep.subr.bf16.mxu0 0
        %1126 = vmatpush1.bf16.xpose.msra.mxu0 0
        %1127 = vmatprep.subr.bf16.mxu0 0
        %1128 = vmatpush1.bf16.xpose.msra.mxu0 0
        %1129 = vmatprep.mubr.bf16.mxu0 0
        %1130 = vmatmul.mubr.bf16.gmra.mrb[0].mxu0 %v1092
        %v1131 = vpop.f32.mrb[0].mxu0
        %v1132 = vadd.f32 %v1035, %v1131
        %v1133 = vpop.f32.mrb[0].mxu0
        %v1134 = vpop.f32.mrb[0].mxu0
        %v1135 = vpop.f32.mrb[0].mxu0
        %1136 = vdwg.mxu0
        %vm1137 = vcmask 64512
        %v1138 = vsel %vm1137, %v1083, -inf
        %1139 = vmax.xlane.f32.xlu0 %v1138
        %v1140 = vpop.xlane.xlu0 %1139
        %v1141 = vsel %vm1137, %v1132, -inf
        %1142 = vmax.xlane.f32.xlu0 %v1141
        %v1143 = vpop.xlane.xlu0 %1142
        %v1144 = vsub.f32 %v1083, %v1140
        %v1145 = vsub.f32 %v1132, %v1143
        %v1146 = vmul.f32 %v1144, 1.442695
        %v1147 = vpow.pop %v1146
        %v1148 = vmul.f32 %v1145, 1.442695
        %v1149 = vpow.pop %v1148
        %v1150 = vsel %vm1137, %v1147, 0.0
        %1151 = vadd.xlane.f32.xlu0 %v1150
        %v1152 = vpop.xlane.xlu0 %1151
        %v1153 = vsel %vm1137, %v1149, 0.0
        %1154 = vadd.xlane.f32.xlu0 %v1153
        %v1155 = vpop.xlane.xlu0 %1154
        %v1156 = vrcp.pop %v1152
        %v1157 = vrcp.pop %v1155
        %v1158 = vmul.f32 %v1147, %v1156
        %v1159 = vmul.f32 %v1149, %v1157
        %v1160 = vpack.c.bf16 %v1158, %v1158
        %v1161 = vpack.c.bf16 %v1159, %v1159
        %1162 = vrot.lane.b32.xlu0 %v1024, 64
        %v1163 = vpop.permute.xlu0 %1162
        %v1165 = vsel %vm1137, %v1160, 0
        %vm1167 = vcmask 1043456
        %v1169 = vsel %vm1167, %v1163, 0
        %1171 = vmatprep.subr.bf16.mxu0 0
        %1172 = vmatpush1.bf16.msra.mxu0 %v1169
        %1173 = vmatprep.subr.bf16.mxu0 0
        %1174 = vmatpush1.bf16.msra.mxu0 0
        %1175 = vmatprep.subr.bf16.mxu0 0
        %1176 = vmatpush1.bf16.msra.mxu0 0
        %1177 = vmatprep.subr.bf16.mxu0 0
        %1178 = vmatpush1.bf16.msra.mxu0 0
        %1179 = vmatprep.subr.bf16.mxu0 0
        %1180 = vmatpush1.bf16.msra.mxu0 0
        %1181 = vmatprep.subr.bf16.mxu0 0
        %1182 = vmatpush1.bf16.msra.mxu0 0
        %1183 = vmatprep.subr.bf16.mxu0 0
        %1184 = vmatpush1.bf16.msra.mxu0 0
        %1185 = vmatprep.subr.bf16.mxu0 0
        %1186 = vmatpush1.bf16.msra.mxu0 0
        %1187 = vmatprep.subr.bf16.mxu0 0
        %1188 = vmatpush1.bf16.msra.mxu0 0
        %1189 = vmatprep.subr.bf16.mxu0 0
        %1190 = vmatpush1.bf16.msra.mxu0 0
        %1191 = vmatprep.subr.bf16.mxu0 0
        %1192 = vmatpush1.bf16.msra.mxu0 0
        %1193 = vmatprep.subr.bf16.mxu0 0
        %1194 = vmatpush1.bf16.msra.mxu0 0
        %1195 = vmatprep.subr.bf16.mxu0 0
        %1196 = vmatpush1.bf16.msra.mxu0 0
        %1197 = vmatprep.subr.bf16.mxu0 0
        %1198 = vmatpush1.bf16.msra.mxu0 0
        %1199 = vmatprep.subr.bf16.mxu0 0
        %1200 = vmatpush1.bf16.msra.mxu0 0
        %1201 = vmatprep.subr.bf16.mxu0 0
        %1202 = vmatpush1.bf16.msra.mxu0 0
        %1203 = vmatprep.mubr.bf16.mxu0 0
        %1204 = vmatmul.mubr.bf16.gmra.mrb[0].mxu0 %v1165
        %v1205 = vpop.f32.mrb[0].mxu0
        %v1206 = vadd.f32 0.0, %v1205
        %v1207 = vpop.f32.mrb[0].mxu0
        %v1208 = vpop.f32.mrb[0].mxu0
        %v1209 = vpop.f32.mrb[0].mxu0
        %1210 = vdwg.mxu0
        %1211 = vrot.lane.b32.xlu0 %v1025, 64
        %v1212 = vpop.permute.xlu0 %1211
        %v1214 = vsel %vm1137, %v1161, 0
        %v1217 = vsel %vm1167, %v1212, 0
        %1219 = vmatprep.subr.bf16.mxu0 0
        %1220 = vmatpush1.bf16.msra.mxu0 %v1217
        %1221 = vmatprep.subr.bf16.mxu0 0
        %1222 = vmatpush1.bf16.msra.mxu0 0
        %1223 = vmatprep.subr.bf16.mxu0 0
        %1224 = vmatpush1.bf16.msra.mxu0 0
        %1225 = vmatprep.subr.bf16.mxu0 0
        %1226 = vmatpush1.bf16.msra.mxu0 0
        %1227 = vmatprep.subr.bf16.mxu0 0
        %1228 = vmatpush1.bf16.msra.mxu0 0
        %1229 = vmatprep.subr.bf16.mxu0 0
        %1230 = vmatpush1.bf16.msra.mxu0 0
        %1231 = vmatprep.subr.bf16.mxu0 0
        %1232 = vmatpush1.bf16.msra.mxu0 0
        %1233 = vmatprep.subr.bf16.mxu0 0
        %1234 = vmatpush1.bf16.msra.mxu0 0
        %1235 = vmatprep.subr.bf16.mxu0 0
        %1236 = vmatpush1.bf16.msra.mxu0 0
        %1237 = vmatprep.subr.bf16.mxu0 0
        %1238 = vmatpush1.bf16.msra.mxu0 0
        %1239 = vmatprep.subr.bf16.mxu0 0
        %1240 = vmatpush1.bf16.msra.mxu0 0
        %1241 = vmatprep.subr.bf16.mxu0 0
        %1242 = vmatpush1.bf16.msra.mxu0 0
        %1243 = vmatprep.subr.bf16.mxu0 0
        %1244 = vmatpush1.bf16.msra.mxu0 0
        %1245 = vmatprep.subr.bf16.mxu0 0
        %1246 = vmatpush1.bf16.msra.mxu0 0
        %1247 = vmatprep.subr.bf16.mxu0 0
        %1248 = vmatpush1.bf16.msra.mxu0 0
        %1249 = vmatprep.subr.bf16.mxu0 0
        %1250 = vmatpush1.bf16.msra.mxu0 0
        %1251 = vmatprep.mubr.bf16.mxu0 0
        %1252 = vmatmul.mubr.bf16.gmra.mrb[0].mxu0 %v1214
        %v1253 = vpop.f32.mrb[0].mxu0
        %v1254 = vadd.f32 0.0, %v1253
        %v1255 = vpop.f32.mrb[0].mxu0
        %v1256 = vpop.f32.mrb[0].mxu0
        %v1257 = vpop.f32.mrb[0].mxu0
        %1258 = vdwg.mxu0
        %v1259 = vpack.c.bf16 %v1206, %v1206
        %v1260 = vpack.c.bf16 %v1254, %v1254
        %vm1261 = vcmask 125952
        %1262 = vst.msk [vmem:[#allocation2] sm:$0xf] %vm1261, %v1259
        %1263 = vst.msk [vmem:[#allocation2 + $0x4] sm:$0xf] %vm1261, %v1260
        %1264 = vrot.lane.b32.xlu0 %v1024, 112
        %v1265 = vpop.permute.xlu0 %1264
        %1266 = vrot.lane.b32.xlu0 %v1024, 80
        %v1267 = vpop.permute.xlu0 %1266
        %v1269 = vsel %vm1041, %v1265, 0
        %v1272 = vsel %vm1041, %v1267, 0
        %1274 = vmatprep.subr.bf16.mxu0 0
        %1275 = vmatpush1.bf16.xpose.msra.mxu0 %v1272
        %1276 = vmatprep.subr.bf16.mxu0 0
        %1277 = vmatpush1.bf16.xpose.msra.mxu0 0
        %1278 = vmatprep.subr.bf16.mxu0 0
        %1279 = vmatpush1.bf16.xpose.msra.mxu0 0
        %1280 = vmatprep.subr.bf16.mxu0 0
        %1281 = vmatpush1.bf16.xpose.msra.mxu0 0
        %1282 = vmatprep.subr.bf16.mxu0 0
        %1283 = vmatpush1.bf16.xpose.msra.mxu0 0
        %1284 = vmatprep.subr.bf16.mxu0 0
        %1285 = vmatpush1.bf16.xpose.msra.mxu0 0
        %1286 = vmatprep.subr.bf16.mxu0 0
        %1287 = vmatpush1.bf16.xpose.msra.mxu0 0
        %1288 = vmatprep.subr.bf16.mxu0 0
        %1289 = vmatpush1.bf16.xpose.msra.mxu0 0
        %1290 = vmatprep.subr.bf16.mxu0 0
        %1291 = vmatpush1.bf16.xpose.msra.mxu0 0
        %1292 = vmatprep.subr.bf16.mxu0 0
        %1293 = vmatpush1.bf16.xpose.msra.mxu0 0
        %1294 = vmatprep.subr.bf16.mxu0 0
        %1295 = vmatpush1.bf16.xpose.msra.mxu0 0
        %1296 = vmatprep.subr.bf16.mxu0 0
        %1297 = vmatpush1.bf16.xpose.msra.mxu0 0
        %1298 = vmatprep.subr.bf16.mxu0 0
        %1299 = vmatpush1.bf16.xpose.msra.mxu0 0
        %1300 = vmatprep.subr.bf16.mxu0 0
        %1301 = vmatpush1.bf16.xpose.msra.mxu0 0
        %1302 = vmatprep.subr.bf16.mxu0 0
        %1303 = vmatpush1.bf16.xpose.msra.mxu0 0
        %1304 = vmatprep.subr.bf16.mxu0 0
        %1305 = vmatpush1.bf16.xpose.msra.mxu0 0
        %1306 = vmatprep.mubr.bf16.mxu0 0
        %1307 = vmatmul.mubr.bf16.gmra.mrb[0].mxu0 %v1269
        %v1308 = vpop.f32.mrb[0].mxu0
        %v1309 = vadd.f32 %v1031, %v1308
        %v1310 = vpop.f32.mrb[0].mxu0
        %v1311 = vpop.f32.mrb[0].mxu0
        %v1312 = vpop.f32.mrb[0].mxu0
        %1313 = vdwg.mxu0
        %1314 = vrot.lane.b32.xlu0 %v1025, 112
        %v1315 = vpop.permute.xlu0 %1314
        %1316 = vrot.lane.b32.xlu0 %v1025, 80
        %v1317 = vpop.permute.xlu0 %1316
        %v1319 = vsel %vm1041, %v1315, 0
        %v1322 = vsel %vm1041, %v1317, 0
        %1324 = vmatprep.subr.bf16.mxu0 0
        %1325 = vmatpush1.bf16.xpose.msra.mxu0 %v1322
        %1326 = vmatprep.subr.bf16.mxu0 0
        %1327 = vmatpush1.bf16.xpose.msra.mxu0 0
        %1328 = vmatprep.subr.bf16.mxu0 0
        %1329 = vmatpush1.bf16.xpose.msra.mxu0 0
        %1330 = vmatprep.subr.bf16.mxu0 0
        %1331 = vmatpush1.bf16.xpose.msra.mxu0 0
        %1332 = vmatprep.subr.bf16.mxu0 0
        %1333 = vmatpush1.bf16.xpose.msra.mxu0 0
        %1334 = vmatprep.subr.bf16.mxu0 0
        %1335 = vmatpush1.bf16.xpose.msra.mxu0 0
        %1336 = vmatprep.subr.bf16.mxu0 0
        %1337 = vmatpush1.bf16.xpose.msra.mxu0 0
        %1338 = vmatprep.subr.bf16.mxu0 0
        %1339 = vmatpush1.bf16.xpose.msra.mxu0 0
        %1340 = vmatprep.subr.bf16.mxu0 0
        %1341 = vmatpush1.bf16.xpose.msra.mxu0 0
        %1342 = vmatprep.subr.bf16.mxu0 0
        %1343 = vmatpush1.bf16.xpose.msra.mxu0 0
        %1344 = vmatprep.subr.bf16.mxu0 0
        %1345 = vmatpush1.bf16.xpose.msra.mxu0 0
        %1346 = vmatprep.subr.bf16.mxu0 0
        %1347 = vmatpush1.bf16.xpose.msra.mxu0 0
        %1348 = vmatprep.subr.bf16.mxu0 0
        %1349 = vmatpush1.bf16.xpose.msra.mxu0 0
        %1350 = vmatprep.subr.bf16.mxu0 0
        %1351 = vmatpush1.bf16.xpose.msra.mxu0 0
        %1352 = vmatprep.subr.bf16.mxu0 0
        %1353 = vmatpush1.bf16.xpose.msra.mxu0 0
        %1354 = vmatprep.subr.bf16.mxu0 0
        %1355 = vmatpush1.bf16.xpose.msra.mxu0 0
        %1356 = vmatprep.mubr.bf16.mxu0 0
        %1357 = vmatmul.mubr.bf16.gmra.mrb[0].mxu0 %v1319
        %v1358 = vpop.f32.mrb[0].mxu0
        %v1359 = vadd.f32 %v1035, %v1358
        %v1360 = vpop.f32.mrb[0].mxu0
        %v1361 = vpop.f32.mrb[0].mxu0
        %v1362 = vpop.f32.mrb[0].mxu0
        %1363 = vdwg.mxu0
        %v1364 = vsel %vm1137, %v1309, -inf
        %1365 = vmax.xlane.f32.xlu0 %v1364
        %v1366 = vpop.xlane.xlu0 %1365
        %v1367 = vsel %vm1137, %v1359, -inf
        %1368 = vmax.xlane.f32.xlu0 %v1367
        %v1369 = vpop.xlane.xlu0 %1368
        %v1370 = vsub.f32 %v1309, %v1366
        %v1371 = vsub.f32 %v1359, %v1369
        %v1372 = vmul.f32 %v1370, 1.442695
        %v1373 = vpow.pop %v1372
        %v1374 = vmul.f32 %v1371, 1.442695
        %v1375 = vpow.pop %v1374
        %v1376 = vsel %vm1137, %v1373, 0.0
        %1377 = vadd.xlane.f32.xlu0 %v1376
        %v1378 = vpop.xlane.xlu0 %1377
        %v1379 = vsel %vm1137, %v1375, 0.0
        %1380 = vadd.xlane.f32.xlu0 %v1379
        %v1381 = vpop.xlane.xlu0 %1380
        %v1382 = vrcp.pop %v1378
        %v1383 = vrcp.pop %v1381
        %v1384 = vmul.f32 %v1373, %v1382
        %v1385 = vmul.f32 %v1375, %v1383
        %v1386 = vpack.c.bf16 %v1384, %v1384
        %v1387 = vpack.c.bf16 %v1385, %v1385
        %1388 = vrot.lane.b32.xlu0 %v1024, 48
        %v1389 = vpop.permute.xlu0 %1388
        %v1391 = vsel %vm1137, %v1386, 0
        %v1394 = vsel %vm1167, %v1389, 0
        %1396 = vmatprep.subr.bf16.mxu0 0
        %1397 = vmatpush1.bf16.msra.mxu0 %v1394
        %1398 = vmatprep.subr.bf16.mxu0 0
        %1399 = vmatpush1.bf16.msra.mxu0 0
        %1400 = vmatprep.subr.bf16.mxu0 0
        %1401 = vmatpush1.bf16.msra.mxu0 0
        %1402 = vmatprep.subr.bf16.mxu0 0
        %1403 = vmatpush1.bf16.msra.mxu0 0
        %1404 = vmatprep.subr.bf16.mxu0 0
        %1405 = vmatpush1.bf16.msra.mxu0 0
        %1406 = vmatprep.subr.bf16.mxu0 0
        %1407 = vmatpush1.bf16.msra.mxu0 0
        %1408 = vmatprep.subr.bf16.mxu0 0
        %1409 = vmatpush1.bf16.msra.mxu0 0
        %1410 = vmatprep.subr.bf16.mxu0 0
        %1411 = vmatpush1.bf16.msra.mxu0 0
        %1412 = vmatprep.subr.bf16.mxu0 0
        %1413 = vmatpush1.bf16.msra.mxu0 0
        %1414 = vmatprep.subr.bf16.mxu0 0
        %1415 = vmatpush1.bf16.msra.mxu0 0
        %1416 = vmatprep.subr.bf16.mxu0 0
        %1417 = vmatpush1.bf16.msra.mxu0 0
        %1418 = vmatprep.subr.bf16.mxu0 0
        %1419 = vmatpush1.bf16.msra.mxu0 0
        %1420 = vmatprep.subr.bf16.mxu0 0
        %1421 = vmatpush1.bf16.msra.mxu0 0
        %1422 = vmatprep.subr.bf16.mxu0 0
        %1423 = vmatpush1.bf16.msra.mxu0 0
        %1424 = vmatprep.subr.bf16.mxu0 0
        %1425 = vmatpush1.bf16.msra.mxu0 0
        %1426 = vmatprep.subr.bf16.mxu0 0
        %1427 = vmatpush1.bf16.msra.mxu0 0
        %1428 = vmatprep.mubr.bf16.mxu0 0
        %1429 = vmatmul.mubr.bf16.gmra.mrb[0].mxu0 %v1391
        %v1430 = vpop.f32.mrb[0].mxu0
        %v1431 = vadd.f32 0.0, %v1430
        %v1432 = vpop.f32.mrb[0].mxu0
        %v1433 = vpop.f32.mrb[0].mxu0
        %v1434 = vpop.f32.mrb[0].mxu0
        %1435 = vdwg.mxu0
        %1436 = vrot.lane.b32.xlu0 %v1025, 48
        %v1437 = vpop.permute.xlu0 %1436
        %v1439 = vsel %vm1137, %v1387, 0
        %v1442 = vsel %vm1167, %v1437, 0
        %1444 = vmatprep.subr.bf16.mxu0 0
        %1445 = vmatpush1.bf16.msra.mxu0 %v1442
        %1446 = vmatprep.subr.bf16.mxu0 0
        %1447 = vmatpush1.bf16.msra.mxu0 0
        %1448 = vmatprep.subr.bf16.mxu0 0
        %1449 = vmatpush1.bf16.msra.mxu0 0
        %1450 = vmatprep.subr.bf16.mxu0 0
        %1451 = vmatpush1.bf16.msra.mxu0 0
        %1452 = vmatprep.subr.bf16.mxu0 0
        %1453 = vmatpush1.bf16.msra.mxu0 0
        %1454 = vmatprep.subr.bf16.mxu0 0
        %1455 = vmatpush1.bf16.msra.mxu0 0
        %1456 = vmatprep.subr.bf16.mxu0 0
        %1457 = vmatpush1.bf16.msra.mxu0 0
        %1458 = vmatprep.subr.bf16.mxu0 0
        %1459 = vmatpush1.bf16.msra.mxu0 0
        %1460 = vmatprep.subr.bf16.mxu0 0
        %1461 = vmatpush1.bf16.msra.mxu0 0
        %1462 = vmatprep.subr.bf16.mxu0 0
        %1463 = vmatpush1.bf16.msra.mxu0 0
        %1464 = vmatprep.subr.bf16.mxu0 0
        %1465 = vmatpush1.bf16.msra.mxu0 0
        %1466 = vmatprep.subr.bf16.mxu0 0
        %1467 = vmatpush1.bf16.msra.mxu0 0
        %1468 = vmatprep.subr.bf16.mxu0 0
        %1469 = vmatpush1.bf16.msra.mxu0 0
        %1470 = vmatprep.subr.bf16.mxu0 0
        %1471 = vmatpush1.bf16.msra.mxu0 0
        %1472 = vmatprep.subr.bf16.mxu0 0
        %1473 = vmatpush1.bf16.msra.mxu0 0
        %1474 = vmatprep.subr.bf16.mxu0 0
        %1475 = vmatpush1.bf16.msra.mxu0 0
        %1476 = vmatprep.mubr.bf16.mxu0 0
        %1477 = vmatmul.mubr.bf16.gmra.mrb[0].mxu0 %v1439
        %v1478 = vpop.f32.mrb[0].mxu0
        %v1479 = vadd.f32 0.0, %v1478
        %v1480 = vpop.f32.mrb[0].mxu0
        %v1481 = vpop.f32.mrb[0].mxu0
        %v1482 = vpop.f32.mrb[0].mxu0
        %1483 = vdwg.mxu0
        %v1484 = vpack.c.bf16 %v1431, %v1431
        %v1485 = vpack.c.bf16 %v1479, %v1479
        %v1488 = vunpack.c.l.b16 %v1484
        %v1489 = vunpack.c.l.b16 %v1485
        %v1490 = vpack.c.b16 %v1488, %v1488
        %v1491 = vpack.c.b16 %v1489, %v1489
        %1492 = vrot.lane.b32.xlu0 %v1490, 16
        %v1493 = vpop.permute.xlu0 %1492
        %1494 = vrot.lane.b32.xlu0 %v1491, 16
        %v1495 = vpop.permute.xlu0 %1494
        %vm1498 = vcmask 257152
        %1499 = vst.msk [vmem:[#allocation2] sm:$0xf] %vm1498, %v1493
        %1500 = vst.msk [vmem:[#allocation2 + $0x4] sm:$0xf] %vm1498, %v1495
        %v1501 = vld [vmem:[#allocation2] sm:$0xf]
        %v1502 = vld [vmem:[#allocation2 + $0x4] sm:$0xf]
        %v1503 = vld [vmem:[%s748] sm:$0xf]
        %v1504 = vld [vmem:[%s748 + $0x4] sm:$0xf]
        %v1505 = vld [vmem:[%s748 + $0x8] sm:$0xf]
        %v1506 = vld [vmem:[%s748 + $0xc] sm:$0xf]
        %v1507 = vld [vmem:[%s756] sm:$0x1]
        %v1509 = vlaneseq
        %v1510 = vshrl.u32 %v1509, 7
        %v1511 = vsub.s32 0, %v1510
        %v1512 = vrot.slane %v1507, %v1511
        %v1516 = vunpack.c.l.b16 %v1501
        %v1517 = vunpack.c.l.b16 %v1502
        %v1518 = vpack.c.b16 %v1517, %v1516
        %v1523 = vunpack.c.l.b16 %v1503
        %v1524 = vunpack.c.l.b16 %v1504
        %v1525 = vunpack.c.l.b16 %v1505
        %v1526 = vunpack.c.l.b16 %v1506
        %v1527 = vpack.c.b16 %v1524, %v1523
        %v1528 = vpack.c.b16 %v1526, %v1525
        %v1532 = vsel %vm912, %v1518, 0
        %1534 = vmatprep.subr.bf16.mxu0 0
        %1535 = vmatpush1.bf16.msra.mxu0 %v1527
        %1536 = vmatprep.subr.bf16.mxu0 0
        %1537 = vmatpush1.bf16.msra.mxu0 %v1528
        %1538 = vmatprep.subr.bf16.mxu0 0
        %1539 = vmatpush1.bf16.msra.mxu0 0
        %1540 = vmatprep.subr.bf16.mxu0 0
        %1541 = vmatpush1.bf16.msra.mxu0 0
        %1542 = vmatprep.subr.bf16.mxu0 0
        %1543 = vmatpush1.bf16.msra.mxu0 0
        %1544 = vmatprep.subr.bf16.mxu0 0
        %1545 = vmatpush1.bf16.msra.mxu0 0
        %1546 = vmatprep.subr.bf16.mxu0 0
        %1547 = vmatpush1.bf16.msra.mxu0 0
        %1548 = vmatprep.subr.bf16.mxu0 0
        %1549 = vmatpush1.bf16.msra.mxu0 0
        %1550 = vmatprep.subr.bf16.mxu0 0
        %1551 = vmatpush1.bf16.msra.mxu0 0
        %1552 = vmatprep.subr.bf16.mxu0 0
        %1553 = vmatpush1.bf16.msra.mxu0 0
        %1554 = vmatprep.subr.bf16.mxu0 0
        %1555 = vmatpush1.bf16.msra.mxu0 0
        %1556 = vmatprep.subr.bf16.mxu0 0
        %1557 = vmatpush1.bf16.msra.mxu0 0
        %1558 = vmatprep.subr.bf16.mxu0 0
        %1559 = vmatpush1.bf16.msra.mxu0 0
        %1560 = vmatprep.subr.bf16.mxu0 0
        %1561 = vmatpush1.bf16.msra.mxu0 0
        %1562 = vmatprep.subr.bf16.mxu0 0
        %1563 = vmatpush1.bf16.msra.mxu0 0
        %1564 = vmatprep.subr.bf16.mxu0 0
        %1565 = vmatpush1.bf16.msra.mxu0 0
        %1566 = vmatprep.mubr.bf16.mxu0 0
        %1567 = vmatmul.mubr.bf16.gmra.mrb[0].mxu0 %v1532
        %v1568 = vpop.f32.mrb[0].mxu0
        %v1569 = vadd.f32 %v1512, %v1568
        %v1570 = vpop.f32.mrb[0].mxu0
        %v1571 = vpop.f32.mrb[0].mxu0
        %v1572 = vadd.f32 %v1512, %v1571
        %v1573 = vpop.f32.mrb[0].mxu0
        %1574 = vdwg.mxu0
        %v1575 = vadd.f32 %v906, %v1569
        %v1576 = vadd.f32 %v907, %v1572
        %v1577 = vld [vmem:[%s764] sm:$0x1]
        %v1578 = vld [vmem:[%s772] sm:$0x1]
        %v1579 = vsel %vm912, %v1575, 0.0
        %1580 = vadd.xlane.f32.xlu0 %v1579
        %v1581 = vpop.xlane.xlu0 %1580
        %v1582 = vsel %vm912, %v1576, 0.0
        %1583 = vadd.xlane.f32.xlu0 %v1582
        %v1584 = vpop.xlane.xlu0 %1583
        %v1585 = vmul.f32 %v1581, %v919
        %v1586 = vmul.f32 %v1584, %v919
        %v1587 = vsub.f32 %v1575, %v1585
        %v1588 = vsub.f32 %v1576, %v1586
        %v1589 = vmul.f32 %v1587, %v1587
        %v1590 = vmul.f32 %v1588, %v1588
        %v1591 = vsel %vm912, %v1589, 0.0
        %1592 = vadd.xlane.f32.xlu0 %v1591
        %v1593 = vpop.xlane.xlu0 %1592
        %v1594 = vsel %vm912, %v1590, 0.0
        %1595 = vadd.xlane.f32.xlu0 %v1594
        %v1596 = vpop.xlane.xlu0 %1595
        %v1597 = vmul.f32 %v1593, %v919
        %v1598 = vmul.f32 %v1596, %v919
        %v1599 = vadd.f32 %v1597, 1e-06
        %v1600 = vadd.f32 %v1598, 1e-06
        %v1601 = vrsqrt.pop %v1599
        %v1602 = vrsqrt.pop %v1600
        %v1603 = vmul.f32 %v1587, %v1601
        %v1604 = vmul.f32 %v1588, %v1602
        %v1606 = vlaneseq
        %v1607 = vshrl.u32 %v1606, 7
        %v1608 = vsub.s32 0, %v1607
        %v1609 = vrot.slane %v1577, %v1608
        %v1611 = vmul.f32 %v1603, %v1609
        %v1612 = vmul.f32 %v1604, %v1609
        %v1614 = vlaneseq
        %v1615 = vshrl.u32 %v1614, 7
        %v1616 = vsub.s32 0, %v1615
        %v1617 = vrot.slane %v1578, %v1616
        %v1619 = vadd.f32 %v1611, %v1617
        %v1620 = vadd.f32 %v1612, %v1617
        %v1621 = vpack.c.bf16 %v1620, %v1619
        %v1622 = vld [vmem:[%s781] sm:$0xf]
        %v1623 = vld [vmem:[%s781 + $0x4] sm:$0xf]
        %v1624 = vld [vmem:[%s781 + $0x8] sm:$0xf]
        %v1625 = vld [vmem:[%s781 + $0xc] sm:$0xf]
        %v1626 = vld [vmem:[%s789] sm:$0x1]
        %v1628 = vlaneseq
        %v1629 = vshrl.u32 %v1628, 7
        %v1630 = vsub.s32 0, %v1629
        %v1631 = vrot.slane %v1626, %v1630
        %v1637 = vunpack.c.l.b16 %v1622
        %v1638 = vunpack.c.l.b16 %v1623
        %v1639 = vunpack.c.l.b16 %v1624
        %v1640 = vunpack.c.l.b16 %v1625
        %v1641 = vpack.c.b16 %v1638, %v1637
        %v1642 = vpack.c.b16 %v1640, %v1639
        %v1646 = vsel %vm912, %v1621, 0
        %1648 = vmatprep.subr.bf16.mxu0 0
        %1649 = vmatpush1.bf16.msra.mxu0 %v1641
        %1650 = vmatprep.subr.bf16.mxu0 0
        %1651 = vmatpush1.bf16.msra.mxu0 %v1642
        %1652 = vmatprep.subr.bf16.mxu0 0
        %1653 = vmatpush1.bf16.msra.mxu0 0
        %1654 = vmatprep.subr.bf16.mxu0 0
        %1655 = vmatpush1.bf16.msra.mxu0 0
        %1656 = vmatprep.subr.bf16.mxu0 0
        %1657 = vmatpush1.bf16.msra.mxu0 0
        %1658 = vmatprep.subr.bf16.mxu0 0
        %1659 = vmatpush1.bf16.msra.mxu0 0
        %1660 = vmatprep.subr.bf16.mxu0 0
        %1661 = vmatpush1.bf16.msra.mxu0 0
        %1662 = vmatprep.subr.bf16.mxu0 0
        %1663 = vmatpush1.bf16.msra.mxu0 0
        %1664 = vmatprep.subr.bf16.mxu0 0
        %1665 = vmatpush1.bf16.msra.mxu0 0
        %1666 = vmatprep.subr.bf16.mxu0 0
        %1667 = vmatpush1.bf16.msra.mxu0 0
        %1668 = vmatprep.subr.bf16.mxu0 0
        %1669 = vmatpush1.bf16.msra.mxu0 0
        %1670 = vmatprep.subr.bf16.mxu0 0
        %1671 = vmatpush1.bf16.msra.mxu0 0
        %1672 = vmatprep.subr.bf16.mxu0 0
        %1673 = vmatpush1.bf16.msra.mxu0 0
        %1674 = vmatprep.subr.bf16.mxu0 0
        %1675 = vmatpush1.bf16.msra.mxu0 0
        %1676 = vmatprep.subr.bf16.mxu0 0
        %1677 = vmatpush1.bf16.msra.mxu0 0
        %1678 = vmatprep.subr.bf16.mxu0 0
        %1679 = vmatpush1.bf16.msra.mxu0 0
        %1680 = vmatprep.mubr.bf16.mxu0 0
        %1681 = vmatmul.mubr.bf16.gmra.mrb[0].mxu0 %v1646
        %v1682 = vpop.f32.mrb[0].mxu0
        %v1683 = vadd.f32 %v1631, %v1682
        %v1684 = vpop.f32.mrb[0].mxu0
        %v1685 = vpop.f32.mrb[0].mxu0
        %v1686 = vadd.f32 %v1631, %v1685
        %v1687 = vpop.f32.mrb[0].mxu0
        %1688 = vdwg.mxu0
        %v1689 = vmul.f32 %v1683, 0.5
        %v1690 = vmul.f32 %v1686, 0.5
        %v1691 = vmul.f32 %v1683, 0.044715
        %v1692 = vmul.f32 %v1686, 0.044715
        %v1693 = vmul.f32 %v1691, %v1683
        %v1694 = vmul.f32 %v1692, %v1686
        %v1695 = vmul.f32 %v1693, %v1683
        %v1696 = vmul.f32 %v1694, %v1686
        %v1697 = vadd.f32 %v1683, %v1695
        %v1698 = vadd.f32 %v1686, %v1696
        %v1699 = vmul.f32 %v1697, 0.7978846
        %v1700 = vmul.f32 %v1698, 0.7978846
        %v1701 = vtanh.pop %v1699
        %v1702 = vtanh.pop %v1700
        %v1703 = vadd.f32 %v1701, 1.0
        %v1704 = vadd.f32 %v1702, 1.0
        %v1705 = vmul.f32 %v1689, %v1703
        %v1706 = vmul.f32 %v1690, %v1704
        %v1707 = vpack.c.bf16 %v1706, %v1705
        %v1708 = vld [vmem:[%s798] sm:$0xf]
        %v1709 = vld [vmem:[%s798 + $0x4] sm:$0xf]
        %v1710 = vld [vmem:[%s798 + $0x8] sm:$0xf]
        %v1711 = vld [vmem:[%s798 + $0xc] sm:$0xf]
        %v1712 = vld [vmem:[%s798 + $0x10] sm:$0xf]
        %v1713 = vld [vmem:[%s798 + $0x14] sm:$0xf]
        %v1714 = vld [vmem:[%s798 + $0x18] sm:$0xf]
        %v1715 = vld [vmem:[%s798 + $0x1c] sm:$0xf]
        %v1716 = vld [vmem:[%s806] sm:$0x1]
        %v1718 = vlaneseq
        %v1719 = vshrl.u32 %v1718, 7
        %v1720 = vsub.s32 0, %v1719
        %v1721 = vrot.slane %v1716, %v1720
        %v1731 = vunpack.c.l.b16 %v1708
        %v1732 = vunpack.c.l.b16 %v1709
        %v1733 = vunpack.c.l.b16 %v1710
        %v1734 = vunpack.c.l.b16 %v1711
        %v1735 = vunpack.c.l.b16 %v1712
        %v1736 = vunpack.c.l.b16 %v1713
        %v1737 = vunpack.c.l.b16 %v1714
        %v1738 = vunpack.c.l.b16 %v1715
        %v1739 = vpack.c.b16 %v1732, %v1731
        %v1740 = vpack.c.b16 %v1734, %v1733
        %v1741 = vpack.c.b16 %v1736, %v1735
        %v1742 = vpack.c.b16 %v1738, %v1737
        %vm1747 = vcmask 523264
        %v1749 = vsel %vm1747, %v1707, 0
        %1751 = vmatprep.subr.bf16.mxu0 0
        %1752 = vmatpush1.bf16.msra.mxu0 %v1739
        %1753 = vmatprep.subr.bf16.mxu0 0
        %1754 = vmatpush1.bf16.msra.mxu0 %v1740
        %1755 = vmatprep.subr.bf16.mxu0 0
        %1756 = vmatpush1.bf16.msra.mxu0 %v1741
        %1757 = vmatprep.subr.bf16.mxu0 0
        %1758 = vmatpush1.bf16.msra.mxu0 %v1742
        %1759 = vmatprep.subr.bf16.mxu0 0
        %1760 = vmatpush1.bf16.msra.mxu0 0
        %1761 = vmatprep.subr.bf16.mxu0 0
        %1762 = vmatpush1.bf16.msra.mxu0 0
        %1763 = vmatprep.subr.bf16.mxu0 0
        %1764 = vmatpush1.bf16.msra.mxu0 0
        %1765 = vmatprep.subr.bf16.mxu0 0
        %1766 = vmatpush1.bf16.msra.mxu0 0
        %1767 = vmatprep.subr.bf16.mxu0 0
        %1768 = vmatpush1.bf16.msra.mxu0 0
        %1769 = vmatprep.subr.bf16.mxu0 0
        %1770 = vmatpush1.bf16.msra.mxu0 0
        %1771 = vmatprep.subr.bf16.mxu0 0
        %1772 = vmatpush1.bf16.msra.mxu0 0
        %1773 = vmatprep.subr.bf16.mxu0 0
        %1774 = vmatpush1.bf16.msra.mxu0 0
        %1775 = vmatprep.subr.bf16.mxu0 0
        %1776 = vmatpush1.bf16.msra.mxu0 0
        %1777 = vmatprep.subr.bf16.mxu0 0
        %1778 = vmatpush1.bf16.msra.mxu0 0
        %1779 = vmatprep.subr.bf16.mxu0 0
        %1780 = vmatpush1.bf16.msra.mxu0 0
        %1781 = vmatprep.subr.bf16.mxu0 0
        %1782 = vmatpush1.bf16.msra.mxu0 0
        %1783 = vmatprep.mubr.bf16.mxu0 0
        %1784 = vmatmul.mubr.bf16.gmra.mrb[0].mxu0 %v1749
        %v1785 = vpop.f32.mrb[0].mxu0
        %v1786 = vadd.f32 %v1721, %v1785
        %v1787 = vpop.f32.mrb[0].mxu0
        %v1788 = vpop.f32.mrb[0].mxu0
        %v1789 = vadd.f32 %v1721, %v1788
        %v1790 = vpop.f32.mrb[0].mxu0
        %1791 = vdwg.mxu0
        %v1792 = vadd.f32 %v1575, %v1786
        %v1793 = vadd.f32 %v1576, %v1789
        %1794 = vst.msk [vmem:[#allocation20] sm:$0xff] %vm912, %v1792
        %1795 = vst.msk [vmem:[#allocation20 + $0x8] sm:$0xff] %vm912, %v1793
        // Predicated region
        $region137: #{tpu_custom_call.1} parent=75 // pred_check
          %p1796 = pneg %p422
        $region138: #{tpu_custom_call.1} parent=75 // pred_check_branch
          %1798 = sbr.rel (%p1796) target = $region140
        $region139: #{tpu_custom_call.1} parent=75 // pred_region
          %s1799 = smul.u32 2, %s32
          %s1801 = ssub.s32 256, 256
          %1802 = vsyncadd [#allocation5], %s1801
          %s1803 = smul.addr %s1799, 128
          %s1804 = scalar_lea.hbm %s14, %s1803
          %s1805 = sshll.u32 [#allocation20], 4
          %s1806 = int_to_ptr.vmem [resolvable:$true] %s1805
          %1811 = dma.vmem_to_hbm [thread:$0]  %s1806, 256, %s1804, [#allocation5], 128, 128, 8
        $region140: #{tpu_custom_call.1} parent=75 // pred_fallthru
          _
        // Predicated region
        $region141: #{tpu_custom_call.1} parent=75 // pred_check
          %p1812 = pneg %p422
        $region142: #{tpu_custom_call.1} parent=75 // pred_check_branch
          %1814 = sbr.rel (%p1812) target = $region144
        $region143: #{tpu_custom_call.1} parent=75 // pred_region
          %1815 = dma.done [#allocation5], 256
        $region144: #{tpu_custom_call.1} parent=75 // pred_fallthru
          _
      $region76: #{tpu_custom_call.1} parent=5 // pred_fallthru
        _
      %p1816 = scmp.le.s32.totalorder 2, %s23
      // Predicated region
      $region145: #{tpu_custom_call.1} parent=5 // pred_check
        %p1817 = pneg %p1816
      $region146: #{tpu_custom_call.1} parent=5 // pred_check_branch
        %1819 = sbr.rel (%p1817) target = $region148
      $region147: #{tpu_custom_call.1} parent=5 // pred_region
        %s1820 = ssub.s32 %s23, 2
      $region148: #{tpu_custom_call.1} parent=5 // pred_fallthru
        _
    $region6: #{tpu_custom_call.1} parent=1 // loop_footer
      %s27 = sadd.s32 1, %s23
    $region7: #{tpu_custom_call.1} parent=1 // loop_footer_branch
      %22 = sbr.rel target = $region3
    $region8: #{tpu_custom_call.1} parent=1 // loop_exit
      _
    %1821 = vsyncpa [#allocation4], 1
    %s1822 = scalar_lea.sflag [#allocation4], 1
    %1823 = vsyncpa %s1822, 1
    %1824 = vsyncpa [#allocation7], 1
    %1825 = vsyncpa [#allocation5], 1
    %s1826 = scalar_lea.sflag [#allocation5], 1
    %1827 = vsyncpa %s1826, 1

</llo_original>
